<compile_context>
chip_gen: v7x
topology: tpu7x:2x2x1
jax: 0.10.0
libtpu: 0.0.40
codegen_flags: <defaults>
</compile_context>

<pallas_src>
import functools

import jax
import jax.numpy as jnp
import numpy as np
from jax.experimental import pallas as pl
from jax.experimental.pallas import tpu as pltpu

BN_EPS = 1e-5
EXPAND = 4

_VMEM_LIMIT_BYTES = 48 * 1024 * 1024   # explicit scoped-VMEM cap (safe on v5e/v6e/v7x)
_VMEM_TILE_BUDGET = 24 * 1024 * 1024   # per-kernel tile budget (double-buffered, fits v7x)


# --------------------------------------------------------------------------- #
# Small helpers
# --------------------------------------------------------------------------- #
def _round_up(x, m):
    return (x + m - 1) // m * m


def _choose_tm(m, kp, cp, tm_cap=None):
    """Row-tile size: as large as the VMEM budget allows (512-1024 typical),
    multiple of 8 (sublanes), never larger than the rounded-up row count."""
    avail = _VMEM_TILE_BUDGET - kp * cp * 2          # bf16 weight stays resident
    per_row = 2 * (kp * 2 + cp * 4)                  # double-buffered x(bf16) + y(f32)
    tm = max(128, avail // max(per_row, 1))
    tm = int(min(tm, 1024))
    if tm_cap is not None:
        tm = min(tm, int(tm_cap))
    tm = min(tm, _round_up(m, 8))
    return max(8, (tm // 8) * 8)


def _row(v, cp):
    """(C,) parameter -> zero-padded, lane-dense (1, Cp) f32 row."""
    c = v.shape[0]
    return jnp.pad(v.astype(jnp.float32).reshape(1, c), ((0, 0), (0, cp - c)))


def _fit(a, rows, cols):
    """Slice / zero-pad a 2D slab to exactly (rows, cols)."""
    a = a[: min(a.shape[0], rows), : min(a.shape[1], cols)]
    return jnp.pad(a, ((0, rows - a.shape[0]), (0, cols - a.shape[1])))


# --------------------------------------------------------------------------- #
# Kernel 1: tiled matmul (conv as GEMM) fused with BN sum / sum-of-squares
# --------------------------------------------------------------------------- #
def _make_matmul_stats_kernel(m_valid, need_mask):
    def kernel(x_ref, w_ref, y_ref, s_ref, q_ref):
        i = pl.program_id(0)

        @pl.when(i == 0)
        def _():
            s_ref[...] = jnp.zeros_like(s_ref)
            q_ref[...] = jnp.zeros_like(q_ref)

        y = jnp.dot(x_ref[...], w_ref[...], preferred_element_type=jnp.float32)
        y_ref[...] = y

        if need_mask:  # exclude padded rows from the BN statistics
            tm = y_ref.shape[0]
            row = i * tm + jax.lax.broadcasted_iota(jnp.int32, y.shape, 0)
            ys = jnp.where(row < m_valid, y, 0.0)
        else:
            ys = y
        s_ref[...] += jnp.sum(ys, axis=0, keepdims=True)
        q_ref[...] += jnp.sum(ys * ys, axis=0, keepdims=True)

    return kernel


def conv_bn_stats(x2d, w2d, m_valid, tm_cap=None):
    """x2d: (M, K) f32 (rows >= m_valid; extras are padding), w2d: (K, C) f32.
    Returns y (Mp, Cp) f32, per-channel sum (1, Cp), sum-of-squares (1, Cp), tm."""
    m_in, k_in = x2d.shape
    assert w2d.shape[0] == k_in
    c = w2d.shape[1]
    kp = _round_up(k_in, 128)
    cp = _round_up(c, 128)
    tm = _choose_tm(m_in, kp, cp, tm_cap)
    mp = _round_up(m_in, tm)

    xb = jnp.pad(x2d.astype(jnp.float32),
                 ((0, mp - m_in), (0, kp - k_in))).astype(jnp.bfloat16)
    wb = jnp.pad(w2d.astype(jnp.float32),
                 ((0, kp - k_in), (0, cp - c))).astype(jnp.bfloat16)

    kernel = _make_matmul_stats_kernel(m_valid, need_mask=(mp != m_valid))
    y, s, q = pl.pallas_call(
        kernel,
        out_shape=(jax.ShapeDtypeStruct((mp, cp), jnp.float32),
                   jax.ShapeDtypeStruct((1, cp), jnp.float32),
                   jax.ShapeDtypeStruct((1, cp), jnp.float32)),
        grid_spec=pltpu.PrefetchScalarGridSpec(
            num_scalar_prefetch=0,
            grid=(mp // tm,),
            in_specs=[pl.BlockSpec((tm, kp), lambda i: (i, 0)),
                      pl.BlockSpec((kp, cp), lambda i: (0, 0))],   # weight resident
            out_specs=[pl.BlockSpec((tm, cp), lambda i: (i, 0)),
                       pl.BlockSpec((1, cp), lambda i: (0, 0)),    # stat accumulators
                       pl.BlockSpec((1, cp), lambda i: (0, 0))]),
        compiler_params=pltpu.CompilerParams(
            dimension_semantics=("arbitrary",),        # cross-tile stat accumulation
            vmem_limit_bytes=_VMEM_LIMIT_BYTES),
    )(xb, wb)
    return y, s, q, tm


# --------------------------------------------------------------------------- #
# Kernel 2: tiled BN-apply (+ optional residual / residual-BN) (+ optional ReLU)
# --------------------------------------------------------------------------- #
def _make_bn_apply_kernel(inv_count, relu, res_mode):
    def kernel(*refs):
        if res_mode == "bn":
            (y_ref, s_ref, q_ref, g_ref, b_ref,
             r_ref, rs_ref, rq_ref, rg_ref, rb_ref, o_ref) = refs
        elif res_mode == "raw":
            y_ref, s_ref, q_ref, g_ref, b_ref, r_ref, o_ref = refs
        else:
            y_ref, s_ref, q_ref, g_ref, b_ref, o_ref = refs

        def norm(v, s, q, g, b):
            mean = s * inv_count
            var = jnp.maximum(q * inv_count - mean * mean, 0.0)
            return (v - mean) * (jax.lax.rsqrt(var + BN_EPS) * g) + b

        out = norm(y_ref[...], s_ref[...], q_ref[...], g_ref[...], b_ref[...])
        if res_mode == "bn":
            out = out + norm(r_ref[...], rs_ref[...], rq_ref[...],
                             rg_ref[...], rb_ref[...])
        elif res_mode == "raw":
            out = out + r_ref[...]
        if relu:
            out = jnp.maximum(out, 0.0)
        o_ref[...] = out

    return kernel


def bn_apply(y, s, q, g, b, count, tm, *, relu,
             residual=None, res_stats=None, res_gamma=None, res_beta=None):
    mp, cp = y.shape
    tile = pl.BlockSpec((tm, cp), lambda i: (i, 0))
    row = pl.BlockSpec((1, cp), lambda i: (0, 0))

    if residual is None:
        res_mode, args = None, (y, s, q, g, b)
        in_specs = [tile, row, row, row, row]
    elif res_stats is None:
        res_mode, args = "raw", (y, s, q, g, b, residual)
        in_specs = [tile, row, row, row, row, tile]
    else:
        res_mode = "bn"
        args = (y, s, q, g, b, residual, res_stats[0], res_stats[1],
                res_gamma, res_beta)
        in_specs = [tile, row, row, row, row, tile, row, row, row, row]

    kernel = _make_bn_apply_kernel(1.0 / float(count), relu, res_mode)
    return pl.pallas_call(
        kernel,
        out_shape=jax.ShapeDtypeStruct((mp, cp), jnp.float32),
        grid_spec=pltpu.PrefetchScalarGridSpec(
            num_scalar_prefetch=0,
            grid=(mp // tm,),
            in_specs=in_specs,
            out_specs=tile),
        compiler_params=pltpu.CompilerParams(
            dimension_semantics=("parallel",),          # megacore-shardable
            vmem_limit_bytes=_VMEM_LIMIT_BYTES),
    )(*args)


# --------------------------------------------------------------------------- #
# Parameters (deterministic synthetic init; shapes follow the PyTorch module)
# --------------------------------------------------------------------------- #
def init_params(key, in_channels, inner_channels):
    out_channels = inner_channels * EXPAND
    ks = jax.random.split(key, 16)

    def w(k, shape):
        return (0.1 * jax.random.normal(k, shape)).astype(jnp.float32)

    def gamma(k, c):
        return (1.0 + 0.1 * jax.random.normal(k, (c,))).astype(jnp.float32)

    def beta(k, c):
        return (0.1 * jax.random.normal(k, (c,))).astype(jnp.float32)

    return {
        # conv1: 1x1, in -> inner, no bias (stored as (Cin, Ci))
        "w1": w(ks[0], (in_channels, inner_channels)),
        "g1": gamma(ks[1], inner_channels),
        "b1": beta(ks[2], inner_channels),
        # conv2: 3x3, inner -> inner, stride s, pad 1, no bias (HWIO)
        "w2": w(ks[3], (3, 3, inner_channels, inner_channels)),
        "g2": gamma(ks[4], inner_channels),
        "b2": beta(ks[5], inner_channels),
        # conv3: 1x1, inner -> inner*4, with bias (bias cancels in training-mode BN)
        "w3": w(ks[6], (inner_channels, out_channels)),
        "b3c": w(ks[7], (out_channels,)),
        "g3": gamma(ks[8], out_channels),
        "b3": beta(ks[9], out_channels),
        # downsample: 1x1, in -> inner*4, stride s, no bias, + BN
        "wd": w(ks[10], (in_channels, out_channels)),
        "gd": gamma(ks[11], out_channels),
        "bd": beta(ks[12], out_channels),
    }


# --------------------------------------------------------------------------- #
# Bottleneck forward (Pallas)
# --------------------------------------------------------------------------- #
@functools.partial(jax.jit, static_argnames=("stride", "tm_cap"))
def bottleneck_forward(x_nchw, p, stride=1, tm_cap=None):
    n, cin, h, w = x_nchw.shape
    ci = p["w1"].shape[1]
    co = p["w3"].shape[1]
    ho = (h - 1) // stride + 1
    wo = (w - 1) // stride + 1
    m0 = n * h * w
    m1 = n * ho * wo

    x = jnp.transpose(x_nchw, (0, 2, 3, 1)).astype(jnp.float32)   # NCHW -> NHWC (glue)
    x_flat = x.reshape(m0, cin)

    # conv1 (1x1, no bias) + bn1 stats, then bn1-apply + relu
    y1r, s1, q1, tm1 = conv_bn_stats(x_flat, p["w1"], m0, tm_cap)
    cp1 = y1r.shape[1]
    y1 = bn_apply(y1r, s1, q1, _row(p["g1"], cp1), _row(p["b1"], cp1),
                  m0, tm1, relu=True)

    # conv2 (3x3, stride, pad=1, no bias) as ONE (M, 9*Ci) x (9*Ci, Ci) matmul
    # TODO(synk): build the 3x3 taps in-kernel (halo tiles / pltpu.roll) instead of
    # materializing the 9x im2col slab in HBM (9x extra HBM traffic for this stage).
    y1_sp = y1[:m0, :ci].reshape(n, h, w, ci)
    xp = jnp.pad(y1_sp, ((0, 0), (1, 1), (1, 1), (0, 0)))          # glue: zero pad
    taps = jnp.concatenate(
        [xp[:, dy:dy + stride * (ho - 1) + 1:stride,
               dx:dx + stride * (wo - 1) + 1:stride, :].reshape(m1, ci)
         for dy in range(3) for dx in range(3)], axis=1)           # (m1, 9*ci)
    y2r, s2, q2, tm2 = conv_bn_stats(taps, p["w2"].reshape(9 * ci, ci), m1, tm_cap)
    cp2 = y2r.shape[1]
    y2 = bn_apply(y2r, s2, q2, _row(p["g2"], cp2), _row(p["b2"], cp2),
                  m1, tm2, relu=True)

    # conv3 (1x1) + bn3 stats.  conv3's bias is dropped: a pre-BN per-channel bias
    # is cancelled exactly by the BN mean subtraction (training-mode forward).
    w3p = jnp.zeros((cp2, co), jnp.float32).at[:ci, :].set(p["w3"])
    y3r, s3, q3, tm3 = conv_bn_stats(y2, w3p, m1, tm_cap)
    mp3, cpo = y3r.shape

    # residual branch + final fused normalize(+residual-BN)(+ReLU)
    if stride != 1 or cin != co:
        xd = x[:, ::stride, ::stride, :].reshape(m1, cin)
        dr, sd, qd, _ = conv_bn_stats(xd, p["wd"], m1, tm_cap)
        out = bn_apply(y3r, s3, q3, _row(p["g3"], cpo), _row(p["b3"], cpo),
                       m1, tm3, relu=True,
                       residual=_fit(dr, mp3, cpo),
                       res_stats=(sd, qd),
                       res_gamma=_row(p["gd"], cpo), res_beta=_row(p["bd"], cpo))
    else:
        out = bn_apply(y3r, s3, q3, _row(p["g3"], cpo), _row(p["b3"], cpo),
                       m1, tm3, relu=True,
                       residual=_fit(x_flat, mp3, cpo))            # identity (cin==co)

    out = out[:m1, :co].reshape(n, ho, wo, co)
    return jnp.transpose(out, (0, 3, 1, 2))                        # NHWC -> NCHW


# --------------------------------------------------------------------------- #
# Pure-JAX f32 reference (for correctness check)
# --------------------------------------------------------------------------- #
def ref_forward(x_nchw, p, stride=1):
    x = jnp.transpose(x_nchw, (0, 2, 3, 1)).astype(jnp.float32)
    dn = ("NHWC", "HWIO", "NHWC")
    cin = x.shape[-1]
    ci = p["w1"].shape[1]
    co = p["w3"].shape[1]

    def bn(y, g, b):
        m = jnp.mean(y, axis=(0, 1, 2), keepdims=True)
        v = jnp.var(y, axis=(0, 1, 2), keepdims=True)   # biased, like torch training BN
        return (y - m) * jax.lax.rsqrt(v + BN_EPS) * g + b

    y = jax.lax.conv_general_dilated(
        x, p["w1"].reshape(1, 1, cin, ci), (1, 1), "VALID", dimension_numbers=dn)
    y = jax.nn.relu(bn(y, p["g1"], p["b1"]))
    y = jax.lax.conv_general_dilated(
        y, p["w2"], (stride, stride), ((1, 1), (1, 1)), dimension_numbers=dn)
    y = jax.nn.relu(bn(y, p["g2"], p["b2"]))
    y = jax.lax.conv_general_dilated(
        y, p["w3"].reshape(1, 1, ci, co), (1, 1), "VALID",
        dimension_numbers=dn) + p["b3c"]
    y = bn(y, p["g3"], p["b3"])
    if stride != 1 or cin != co:
        d = jax.lax.conv_general_dilated(
            x, p["wd"].reshape(1, 1, cin, co), (stride, stride), "VALID",
            dimension_numbers=dn)
        d = bn(d, p["gd"], p["bd"])
    else:
        d = x
    return jnp.transpose(jax.nn.relu(y + d), (0, 3, 1, 2))


if __name__ == "__main__":
    key = jax.random.PRNGKey(0)
    kx, kparams = jax.random.split(key)

    N, Cin, H, W = 2, 4, 16, 16
    inner = 4          # out channels = inner*4 = 16 -> downsample branch is active

    x = jax.random.normal(kx, (N, Cin, H, W), dtype=jnp.float32)
    params = init_params(kparams, Cin, inner)

    # (stride, row-tile cap): default big tiles, forced multi-tile grid with
    # row-masked stats (96), and strided path with multi-tile conv1 (128).
    configs = [(1, None), (1, 96), (2, 128)]
    for stride, tm_cap in configs:
        out = jax.block_until_ready(
            bottleneck_forward(x, params, stride=stride, tm_cap=tm_cap))
        ref = jax.block_until_ready(ref_forward(x, params, stride=stride))
        assert out.shape == ref.shape, (out.shape, ref.shape)
        # bf16 MXU operands (f32 accumulation) -> loosened tolerance vs f32 reference.
        np.testing.assert_allclose(np.asarray(out), np.asarray(ref),
                                   atol=1e-1, rtol=5e-2)

    print("KERNEL_OK")
</pallas_src>

<mosaic_0001>
module attributes {stable_mosaic.version = 11 : i64} {
  func.func @kernel(%arg0: i32, %arg1: memref<512x128xbf16, #tpu.memory_space<vmem>>, %arg2: memref<128x128xbf16, #tpu.memory_space<vmem>>, %arg3: memref<512x128xf32, #tpu.memory_space<vmem>>, %arg4: memref<1x128xf32, #tpu.memory_space<vmem>>, %arg5: memref<1x128xf32, #tpu.memory_space<vmem>>) attributes {dimension_semantics = [#tpu.dimension_semantics<arbitrary>], iteration_bounds = array<i64: 1>, scalar_prefetch = 0 : i64, scratch_operands = 0 : i64, tpu.core_type = #tpu.core_type<tc>, window_params = [{transform_indices = @transform_0, window_bounds = array<i64: 512, 128>}, {pipeline_mode = #tpu.pipeline_mode<synchronous>, transform_indices = @transform_1, window_bounds = array<i64: 128, 128>}, {transform_indices = @transform_2, window_bounds = array<i64: 512, 128>}, {pipeline_mode = #tpu.pipeline_mode<synchronous>, transform_indices = @transform_3, window_bounds = array<i64: 1, 128>}, {pipeline_mode = #tpu.pipeline_mode<synchronous>, transform_indices = @transform_4, window_bounds = array<i64: 1, 128>}]} {
    %c0_i32 = arith.constant 0 : i32
    %0 = arith.cmpi eq, %arg0, %c0_i32 : i32
    %1 = arith.extui %0 : i1 to i32
    %c0_i32_0 = arith.constant 0 : i32
    %2 = arith.cmpi ne, %1, %c0_i32_0 : i32
    scf.if %2 {
      %cst_16 = arith.constant 0.000000e+00 : f32
      %18 = vector.broadcast %cst_16 : f32 to vector<1x128xf32>
      %c0_17 = arith.constant 0 : index
      %c0_18 = arith.constant 0 : index
      %19 = vector.load %arg4[%c0_17, %c0_18] : memref<1x128xf32, #tpu.memory_space<vmem>>, vector<1x128xf32>
      tpu.vector_store %arg4[%c0_17, %c0_18], %18 {strides = array<i32>} : memref<1x128xf32, #tpu.memory_space<vmem>>, vector<1x128xf32>,
      %cst_19 = arith.constant 0.000000e+00 : f32
      %20 = vector.broadcast %cst_19 : f32 to vector<1x128xf32>
      %c0_20 = arith.constant 0 : index
      %c0_21 = arith.constant 0 : index
      %21 = vector.load %arg5[%c0_20, %c0_21] : memref<1x128xf32, #tpu.memory_space<vmem>>, vector<1x128xf32>
      tpu.vector_store %arg5[%c0_20, %c0_21], %20 {strides = array<i32>} : memref<1x128xf32, #tpu.memory_space<vmem>>, vector<1x128xf32>,
    } else {
    }
    %c0 = arith.constant 0 : index
    %c0_1 = arith.constant 0 : index
    %3 = vector.load %arg1[%c0, %c0_1] : memref<512x128xbf16, #tpu.memory_space<vmem>>, vector<512x128xbf16>
    %c0_2 = arith.constant 0 : index
    %c0_3 = arith.constant 0 : index
    %4 = vector.load %arg2[%c0_2, %c0_3] : memref<128x128xbf16, #tpu.memory_space<vmem>>, vector<128x128xbf16>
    %cst = arith.constant dense<0.000000e+00> : vector<512x128xf32>
    %5 = tpu.matmul %3, %4, %cst {dimension_numbers = #tpu.dot_dimension_numbers<[1], [0], [0], [1], [0, 0, 1, 1], [], []>} : vector<512x128xbf16>, vector<128x128xbf16>, vector<512x128xf32> -> vector<512x128xf32>
    %c0_4 = arith.constant 0 : index
    %c0_5 = arith.constant 0 : index
    %6 = vector.load %arg3[%c0_4, %c0_5] : memref<512x128xf32, #tpu.memory_space<vmem>>, vector<512x128xf32>
    tpu.vector_store %arg3[%c0_4, %c0_5], %5 {strides = array<i32>} : memref<512x128xf32, #tpu.memory_space<vmem>>, vector<512x128xf32>,
    %c0_6 = arith.constant 0 : index
    %c0_7 = arith.constant 0 : index
    %7 = vector.load %arg4[%c0_6, %c0_7] : memref<1x128xf32, #tpu.memory_space<vmem>>, vector<1x128xf32>
    %cst_8 = arith.constant dense<0.000000e+00> : vector<128xf32>
    %8 = vector.multi_reduction <add>, %5, %cst_8 [0] : vector<512x128xf32> to vector<128xf32>
    %9 = vector.shape_cast %8 : vector<128xf32> to vector<1x128xf32>
    %10 = arith.addf %7, %9 : vector<1x128xf32>
    %c0_9 = arith.constant 0 : index
    %c0_10 = arith.constant 0 : index
    %11 = vector.load %arg4[%c0_9, %c0_10] : memref<1x128xf32, #tpu.memory_space<vmem>>, vector<1x128xf32>
    tpu.vector_store %arg4[%c0_9, %c0_10], %10 {strides = array<i32>} : memref<1x128xf32, #tpu.memory_space<vmem>>, vector<1x128xf32>,
    %c0_11 = arith.constant 0 : index
    %c0_12 = arith.constant 0 : index
    %12 = vector.load %arg5[%c0_11, %c0_12] : memref<1x128xf32, #tpu.memory_space<vmem>>, vector<1x128xf32>
    %13 = arith.mulf %5, %5 : vector<512x128xf32>
    %cst_13 = arith.constant dense<0.000000e+00> : vector<128xf32>
    %14 = vector.multi_reduction <add>, %13, %cst_13 [0] : vector<512x128xf32> to vector<128xf32>
    %15 = vector.shape_cast %14 : vector<128xf32> to vector<1x128xf32>
    %16 = arith.addf %12, %15 : vector<1x128xf32>
    %c0_14 = arith.constant 0 : index
    %c0_15 = arith.constant 0 : index
    %17 = vector.load %arg5[%c0_14, %c0_15] : memref<1x128xf32, #tpu.memory_space<vmem>>, vector<1x128xf32>
    tpu.vector_store %arg5[%c0_14, %c0_15], %16 {strides = array<i32>} : memref<1x128xf32, #tpu.memory_space<vmem>>, vector<1x128xf32>,
    return
  }
  func.func @transform_0(%arg0: i32) -> (i32, i32) {
    %c0_i32 = arith.constant 0 : i32
    %c0_i32_0 = arith.constant 0 : i32
    return %arg0, %c0_i32 : i32, i32
  }
  func.func @transform_1(%arg0: i32) -> (i32, i32) {
    %c0_i32 = arith.constant 0 : i32
    %c0_i32_0 = arith.constant 0 : i32
    %c0_i32_1 = arith.constant 0 : i32
    return %c0_i32, %c0_i32_0 : i32, i32
  }
  func.func @transform_2(%arg0: i32) -> (i32, i32) {
    %c0_i32 = arith.constant 0 : i32
    %c0_i32_0 = arith.constant 0 : i32
    return %arg0, %c0_i32 : i32, i32
  }
  func.func @transform_3(%arg0: i32) -> (i32, i32) {
    %c0_i32 = arith.constant 0 : i32
    %c0_i32_0 = arith.constant 0 : i32
    %c0_i32_1 = arith.constant 0 : i32
    return %c0_i32, %c0_i32_0 : i32, i32
  }
  func.func @transform_4(%arg0: i32) -> (i32, i32) {
    %c0_i32 = arith.constant 0 : i32
    %c0_i32_0 = arith.constant 0 : i32
    %c0_i32_1 = arith.constant 0 : i32
    return %c0_i32, %c0_i32_0 : i32, i32
  }
}

module attributes {stable_mosaic.version = 11 : i64} {
  func.func @kernel(%arg0: i32, %arg1: memref<512x128xf32, #tpu.memory_space<vmem>>, %arg2: memref<1x128xf32, #tpu.memory_space<vmem>>, %arg3: memref<1x128xf32, #tpu.memory_space<vmem>>, %arg4: memref<1x128xf32, #tpu.memory_space<vmem>>, %arg5: memref<1x128xf32, #tpu.memory_space<vmem>>, %arg6: memref<512x128xf32, #tpu.memory_space<vmem>>) attributes {dimension_semantics = [#tpu.dimension_semantics<parallel>], iteration_bounds = array<i64: 1>, scalar_prefetch = 0 : i64, scratch_operands = 0 : i64, tpu.core_type = #tpu.core_type<tc>, window_params = [{transform_indices = @transform_0, window_bounds = array<i64: 512, 128>}, {pipeline_mode = #tpu.pipeline_mode<synchronous>, transform_indices = @transform_1, window_bounds = array<i64: 1, 128>}, {pipeline_mode = #tpu.pipeline_mode<synchronous>, transform_indices = @transform_2, window_bounds = array<i64: 1, 128>}, {pipeline_mode = #tpu.pipeline_mode<synchronous>, transform_indices = @transform_3, window_bounds = array<i64: 1, 128>}, {pipeline_mode = #tpu.pipeline_mode<synchronous>, transform_indices = @transform_4, window_bounds = array<i64: 1, 128>}, {transform_indices = @transform_5, window_bounds = array<i64: 512, 128>}]} {
    %c0 = arith.constant 0 : index
    %c0_0 = arith.constant 0 : index
    %0 = vector.load %arg1[%c0, %c0_0] : memref<512x128xf32, #tpu.memory_space<vmem>>, vector<512x128xf32>
    %c0_1 = arith.constant 0 : index
    %c0_2 = arith.constant 0 : index
    %1 = vector.load %arg2[%c0_1, %c0_2] : memref<1x128xf32, #tpu.memory_space<vmem>>, vector<1x128xf32>
    %c0_3 = arith.constant 0 : index
    %c0_4 = arith.constant 0 : index
    %2 = vector.load %arg3[%c0_3, %c0_4] : memref<1x128xf32, #tpu.memory_space<vmem>>, vector<1x128xf32>
    %c0_5 = arith.constant 0 : index
    %c0_6 = arith.constant 0 : index
    %3 = vector.load %arg4[%c0_5, %c0_6] : memref<1x128xf32, #tpu.memory_space<vmem>>, vector<1x128xf32>
    %c0_7 = arith.constant 0 : index
    %c0_8 = arith.constant 0 : index
    %4 = vector.load %arg5[%c0_7, %c0_8] : memref<1x128xf32, #tpu.memory_space<vmem>>, vector<1x128xf32>
    %cst = arith.constant 0.001953125 : f32
    %5 = vector.broadcast %cst : f32 to vector<1x128xf32>
    %6 = arith.mulf %1, %5 : vector<1x128xf32>
    %cst_9 = arith.constant 0.001953125 : f32
    %7 = vector.broadcast %cst_9 : f32 to vector<1x128xf32>
    %8 = arith.mulf %2, %7 : vector<1x128xf32>
    %9 = arith.mulf %6, %6 : vector<1x128xf32>
    %10 = arith.subf %8, %9 : vector<1x128xf32>
    %cst_10 = arith.constant 0.000000e+00 : f32
    %11 = vector.broadcast %cst_10 : f32 to vector<1x128xf32>
    %12 = arith.maximumf %10, %11 : vector<1x128xf32>
    %13 = vector.broadcast %6 : vector<1x128xf32> to vector<512x128xf32>
    %14 = arith.subf %0, %13 : vector<512x128xf32>
    %cst_11 = arith.constant 9.99999974E-6 : f32
    %15 = vector.broadcast %cst_11 : f32 to vector<1x128xf32>
    %16 = arith.addf %12, %15 : vector<1x128xf32>
    %17 = math.rsqrt %16 : vector<1x128xf32>
    %18 = arith.mulf %17, %3 : vector<1x128xf32>
    %19 = vector.broadcast %18 : vector<1x128xf32> to vector<512x128xf32>
    %20 = arith.mulf %14, %19 : vector<512x128xf32>
    %21 = vector.broadcast %4 : vector<1x128xf32> to vector<512x128xf32>
    %22 = arith.addf %20, %21 : vector<512x128xf32>
    %cst_12 = arith.constant 0.000000e+00 : f32
    %23 = vector.broadcast %cst_12 : f32 to vector<512x128xf32>
    %24 = arith.maximumf %22, %23 : vector<512x128xf32>
    %c0_13 = arith.constant 0 : index
    %c0_14 = arith.constant 0 : index
    %25 = vector.load %arg6[%c0_13, %c0_14] : memref<512x128xf32, #tpu.memory_space<vmem>>, vector<512x128xf32>
    tpu.vector_store %arg6[%c0_13, %c0_14], %24 {strides = array<i32>} : memref<512x128xf32, #tpu.memory_space<vmem>>, vector<512x128xf32>,
    return
  }
  func.func @transform_0(%arg0: i32) -> (i32, i32) {
    %c0_i32 = arith.constant 0 : i32
    %c0_i32_0 = arith.constant 0 : i32
    return %arg0, %c0_i32 : i32, i32
  }
  func.func @transform_1(%arg0: i32) -> (i32, i32) {
    %c0_i32 = arith.constant 0 : i32
    %c0_i32_0 = arith.constant 0 : i32
    %c0_i32_1 = arith.constant 0 : i32
    return %c0_i32, %c0_i32_0 : i32, i32
  }
  func.func @transform_2(%arg0: i32) -> (i32, i32) {
    %c0_i32 = arith.constant 0 : i32
    %c0_i32_0 = arith.constant 0 : i32
    %c0_i32_1 = arith.constant 0 : i32
    return %c0_i32, %c0_i32_0 : i32, i32
  }
  func.func @transform_3(%arg0: i32) -> (i32, i32) {
    %c0_i32 = arith.constant 0 : i32
    %c0_i32_0 = arith.constant 0 : i32
    %c0_i32_1 = arith.constant 0 : i32
    return %c0_i32, %c0_i32_0 : i32, i32
  }
  func.func @transform_4(%arg0: i32) -> (i32, i32) {
    %c0_i32 = arith.constant 0 : i32
    %c0_i32_0 = arith.constant 0 : i32
    %c0_i32_1 = arith.constant 0 : i32
    return %c0_i32, %c0_i32_0 : i32, i32
  }
  func.func @transform_5(%arg0: i32) -> (i32, i32) {
    %c0_i32 = arith.constant 0 : i32
    %c0_i32_0 = arith.constant 0 : i32
    return %arg0, %c0_i32 : i32, i32
  }
}

module attributes {stable_mosaic.version = 11 : i64} {
  func.func @kernel(%arg0: i32, %arg1: memref<512x128xf32, #tpu.memory_space<vmem>>, %arg2: memref<1x128xf32, #tpu.memory_space<vmem>>, %arg3: memref<1x128xf32, #tpu.memory_space<vmem>>, %arg4: memref<1x128xf32, #tpu.memory_space<vmem>>, %arg5: memref<1x128xf32, #tpu.memory_space<vmem>>, %arg6: memref<512x128xf32, #tpu.memory_space<vmem>>, %arg7: memref<1x128xf32, #tpu.memory_space<vmem>>, %arg8: memref<1x128xf32, #tpu.memory_space<vmem>>, %arg9: memref<1x128xf32, #tpu.memory_space<vmem>>, %arg10: memref<1x128xf32, #tpu.memory_space<vmem>>, %arg11: memref<512x128xf32, #tpu.memory_space<vmem>>) attributes {dimension_semantics = [#tpu.dimension_semantics<parallel>], iteration_bounds = array<i64: 1>, scalar_prefetch = 0 : i64, scratch_operands = 0 : i64, tpu.core_type = #tpu.core_type<tc>, window_params = [{transform_indices = @transform_0, window_bounds = array<i64: 512, 128>}, {pipeline_mode = #tpu.pipeline_mode<synchronous>, transform_indices = @transform_1, window_bounds = array<i64: 1, 128>}, {pipeline_mode = #tpu.pipeline_mode<synchronous>, transform_indices = @transform_2, window_bounds = array<i64: 1, 128>}, {pipeline_mode = #tpu.pipeline_mode<synchronous>, transform_indices = @transform_3, window_bounds = array<i64: 1, 128>}, {pipeline_mode = #tpu.pipeline_mode<synchronous>, transform_indices = @transform_4, window_bounds = array<i64: 1, 128>}, {transform_indices = @transform_5, window_bounds = array<i64: 512, 128>}, {pipeline_mode = #tpu.pipeline_mode<synchronous>, transform_indices = @transform_6, window_bounds = array<i64: 1, 128>}, {pipeline_mode = #tpu.pipeline_mode<synchronous>, transform_indices = @transform_7, window_bounds = array<i64: 1, 128>}, {pipeline_mode = #tpu.pipeline_mode<synchronous>, transform_indices = @transform_8, window_bounds = array<i64: 1, 128>}, {pipeline_mode = #tpu.pipeline_mode<synchronous>, transform_indices = @transform_9, window_bounds = array<i64: 1, 128>}, {transform_indices = @transform_10, window_bounds = array<i64: 512, 128>}]} {
    %c0 = arith.constant 0 : index
    %c0_0 = arith.constant 0 : index
    %0 = vector.load %arg1[%c0, %c0_0] : memref<512x128xf32, #tpu.memory_space<vmem>>, vector<512x128xf32>
    %c0_1 = arith.constant 0 : index
    %c0_2 = arith.constant 0 : index
    %1 = vector.load %arg2[%c0_1, %c0_2] : memref<1x128xf32, #tpu.memory_space<vmem>>, vector<1x128xf32>
    %c0_3 = arith.constant 0 : index
    %c0_4 = arith.constant 0 : index
    %2 = vector.load %arg3[%c0_3, %c0_4] : memref<1x128xf32, #tpu.memory_space<vmem>>, vector<1x128xf32>
    %c0_5 = arith.constant 0 : index
    %c0_6 = arith.constant 0 : index
    %3 = vector.load %arg4[%c0_5, %c0_6] : memref<1x128xf32, #tpu.memory_space<vmem>>, vector<1x128xf32>
    %c0_7 = arith.constant 0 : index
    %c0_8 = arith.constant 0 : index
    %4 = vector.load %arg5[%c0_7, %c0_8] : memref<1x128xf32, #tpu.memory_space<vmem>>, vector<1x128xf32>
    %cst = arith.constant 0.001953125 : f32
    %5 = vector.broadcast %cst : f32 to vector<1x128xf32>
    %6 = arith.mulf %1, %5 : vector<1x128xf32>
    %cst_9 = arith.constant 0.001953125 : f32
    %7 = vector.broadcast %cst_9 : f32 to vector<1x128xf32>
    %8 = arith.mulf %2, %7 : vector<1x128xf32>
    %9 = arith.mulf %6, %6 : vector<1x128xf32>
    %10 = arith.subf %8, %9 : vector<1x128xf32>
    %cst_10 = arith.constant 0.000000e+00 : f32
    %11 = vector.broadcast %cst_10 : f32 to vector<1x128xf32>
    %12 = arith.maximumf %10, %11 : vector<1x128xf32>
    %13 = vector.broadcast %6 : vector<1x128xf32> to vector<512x128xf32>
    %14 = arith.subf %0, %13 : vector<512x128xf32>
    %cst_11 = arith.constant 9.99999974E-6 : f32
    %15 = vector.broadcast %cst_11 : f32 to vector<1x128xf32>
    %16 = arith.addf %12, %15 : vector<1x128xf32>
    %17 = math.rsqrt %16 : vector<1x128xf32>
    %18 = arith.mulf %17, %3 : vector<1x128xf32>
    %19 = vector.broadcast %18 : vector<1x128xf32> to vector<512x128xf32>
    %20 = arith.mulf %14, %19 : vector<512x128xf32>
    %21 = vector.broadcast %4 : vector<1x128xf32> to vector<512x128xf32>
    %22 = arith.addf %20, %21 : vector<512x128xf32>
    %c0_12 = arith.constant 0 : index
    %c0_13 = arith.constant 0 : index
    %23 = vector.load %arg6[%c0_12, %c0_13] : memref<512x128xf32, #tpu.memory_space<vmem>>, vector<512x128xf32>
    %c0_14 = arith.constant 0 : index
    %c0_15 = arith.constant 0 : index
    %24 = vector.load %arg7[%c0_14, %c0_15] : memref<1x128xf32, #tpu.memory_space<vmem>>, vector<1x128xf32>
    %c0_16 = arith.constant 0 : index
    %c0_17 = arith.constant 0 : index
    %25 = vector.load %arg8[%c0_16, %c0_17] : memref<1x128xf32, #tpu.memory_space<vmem>>, vector<1x128xf32>
    %c0_18 = arith.constant 0 : index
    %c0_19 = arith.constant 0 : index
    %26 = vector.load %arg9[%c0_18, %c0_19] : memref<1x128xf32, #tpu.memory_space<vmem>>, vector<1x128xf32>
    %c0_20 = arith.constant 0 : index
    %c0_21 = arith.constant 0 : index
    %27 = vector.load %arg10[%c0_20, %c0_21] : memref<1x128xf32, #tpu.memory_space<vmem>>, vector<1x128xf32>
    %cst_22 = arith.constant 0.001953125 : f32
    %28 = vector.broadcast %cst_22 : f32 to vector<1x128xf32>
    %29 = arith.mulf %24, %28 : vector<1x128xf32>
    %cst_23 = arith.constant 0.001953125 : f32
    %30 = vector.broadcast %cst_23 : f32 to vector<1x128xf32>
    %31 = arith.mulf %25, %30 : vector<1x128xf32>
    %32 = arith.mulf %29, %29 : vector<1x128xf32>
    %33 = arith.subf %31, %32 : vector<1x128xf32>
    %cst_24 = arith.constant 0.000000e+00 : f32
    %34 = vector.broadcast %cst_24 : f32 to vector<1x128xf32>
    %35 = arith.maximumf %33, %34 : vector<1x128xf32>
    %36 = vector.broadcast %29 : vector<1x128xf32> to vector<512x128xf32>
    %37 = arith.subf %23, %36 : vector<512x128xf32>
    %cst_25 = arith.constant 9.99999974E-6 : f32
    %38 = vector.broadcast %cst_25 : f32 to vector<1x128xf32>
    %39 = arith.addf %35, %38 : vector<1x128xf32>
    %40 = math.rsqrt %39 : vector<1x128xf32>
    %41 = arith.mulf %40, %26 : vector<1x128xf32>
    %42 = vector.broadcast %41 : vector<1x128xf32> to vector<512x128xf32>
    %43 = arith.mulf %37, %42 : vector<512x128xf32>
    %44 = vector.broadcast %27 : vector<1x128xf32> to vector<512x128xf32>
    %45 = arith.addf %43, %44 : vector<512x128xf32>
    %46 = arith.addf %22, %45 : vector<512x128xf32>
    %cst_26 = arith.constant 0.000000e+00 : f32
    %47 = vector.broadcast %cst_26 : f32 to vector<512x128xf32>
    %48 = arith.maximumf %46, %47 : vector<512x128xf32>
    %c0_27 = arith.constant 0 : index
    %c0_28 = arith.constant 0 : index
    %49 = vector.load %arg11[%c0_27, %c0_28] : memref<512x128xf32, #tpu.memory_space<vmem>>, vector<512x128xf32>
    tpu.vector_store %arg11[%c0_27, %c0_28], %48 {strides = array<i32>} : memref<512x128xf32, #tpu.memory_space<vmem>>, vector<512x128xf32>,
    return
  }
  func.func @transform_0(%arg0: i32) -> (i32, i32) {
    %c0_i32 = arith.constant 0 : i32
    %c0_i32_0 = arith.constant 0 : i32
    return %arg0, %c0_i32 : i32, i32
  }
  func.func @transform_1(%arg0: i32) -> (i32, i32) {
    %c0_i32 = arith.constant 0 : i32
    %c0_i32_0 = arith.constant 0 : i32
    %c0_i32_1 = arith.constant 0 : i32
    return %c0_i32, %c0_i32_0 : i32, i32
  }
  func.func @transform_2(%arg0: i32) -> (i32, i32) {
    %c0_i32 = arith.constant 0 : i32
    %c0_i32_0 = arith.constant 0 : i32
    %c0_i32_1 = arith.constant 0 : i32
    return %c0_i32, %c0_i32_0 : i32, i32
  }
  func.func @transform_3(%arg0: i32) -> (i32, i32) {
    %c0_i32 = arith.constant 0 : i32
    %c0_i32_0 = arith.constant 0 : i32
    %c0_i32_1 = arith.constant 0 : i32
    return %c0_i32, %c0_i32_0 : i32, i32
  }
  func.func @transform_4(%arg0: i32) -> (i32, i32) {
    %c0_i32 = arith.constant 0 : i32
    %c0_i32_0 = arith.constant 0 : i32
    %c0_i32_1 = arith.constant 0 : i32
    return %c0_i32, %c0_i32_0 : i32, i32
  }
  func.func @transform_5(%arg0: i32) -> (i32, i32) {
    %c0_i32 = arith.constant 0 : i32
    %c0_i32_0 = arith.constant 0 : i32
    return %arg0, %c0_i32 : i32, i32
  }
  func.func @transform_6(%arg0: i32) -> (i32, i32) {
    %c0_i32 = arith.constant 0 : i32
    %c0_i32_0 = arith.constant 0 : i32
    %c0_i32_1 = arith.constant 0 : i32
    return %c0_i32, %c0_i32_0 : i32, i32
  }
  func.func @transform_7(%arg0: i32) -> (i32, i32) {
    %c0_i32 = arith.constant 0 : i32
    %c0_i32_0 = arith.constant 0 : i32
    %c0_i32_1 = arith.constant 0 : i32
    return %c0_i32, %c0_i32_0 : i32, i32
  }
  func.func @transform_8(%arg0: i32) -> (i32, i32) {
    %c0_i32 = arith.constant 0 : i32
    %c0_i32_0 = arith.constant 0 : i32
    %c0_i32_1 = arith.constant 0 : i32
    return %c0_i32, %c0_i32_0 : i32, i32
  }
  func.func @transform_9(%arg0: i32) -> (i32, i32) {
    %c0_i32 = arith.constant 0 : i32
    %c0_i32_0 = arith.constant 0 : i32
    %c0_i32_1 = arith.constant 0 : i32
    return %c0_i32, %c0_i32_0 : i32, i32
  }
  func.func @transform_10(%arg0: i32) -> (i32, i32) {
    %c0_i32 = arith.constant 0 : i32
    %c0_i32_0 = arith.constant 0 : i32
    return %arg0, %c0_i32 : i32, i32
  }
}

</mosaic_0001>

<llo_original>
// kernel: bottleneck_forward.8
$region0: #{bottleneck_forward.8}
  #allocation0 [shape = 'u32[]', space=smem, size = 0x4, offset = 0x4, fixed_abs, tag = 'smem constant byte address 0x4 - core index']
  #allocation1 [shape = 'u32[144,128]{1,0:T(1,128)}', space=vmem, size = 0x12000, scoped, tag = 'internal scratch']
  %s0 = inlined_call_operand.vmem [shape: f32[512,128], index: 0, kind: input, shape index: {}]
  %s1 = inlined_call_operand.vmem [shape: f32[1,128], index: 1, kind: input, shape index: {}]
  %s2 = inlined_call_operand.vmem [shape: f32[1,128], index: 2, kind: input, shape index: {}]
  %s3 = inlined_call_operand.vmem [shape: f32[1,128], index: 3, kind: input, shape index: {}]
  %s4 = inlined_call_operand.vmem [shape: f32[1,128], index: 4, kind: input, shape index: {}]
  %s5 = inlined_call_operand.vmem [shape: f32[512,128], index: 5, kind: output, shape index: {}]
  %s6 = sld [smem:[#allocation0]]
  $region30: #{bottleneck_forward.8} parent=0
    _
  %s8 = ssub.s32 1, %s6
  %s9 = scalar_select 0, %s8, %s6
  // Predicated region
  $region2: #{bottleneck_forward.8} parent=0 // pred_check
    _
  $region3: #{bottleneck_forward.8} parent=0 // pred_check_branch
    %11 = sbr.rel (0) target = $region5
  $region4: #{bottleneck_forward.8} parent=0 // pred_region
    _
  $region5: #{bottleneck_forward.8} parent=0 // pred_fallthru
    _
  // Predicated region
  $region6: #{bottleneck_forward.8} parent=0 // pred_check
    _
  $region7: #{bottleneck_forward.8} parent=0 // pred_check_branch
    %13 = sbr.rel (0) target = $region9
  $region8: #{bottleneck_forward.8} parent=0 // pred_region
    _
  $region9: #{bottleneck_forward.8} parent=0 // pred_fallthru
    _
  // Predicated region
  $region10: #{bottleneck_forward.8} parent=0 // pred_check
    _
  $region11: #{bottleneck_forward.8} parent=0 // pred_check_branch
    %15 = sbr.rel (0) target = $region13
  $region12: #{bottleneck_forward.8} parent=0 // pred_region
    _
  $region13: #{bottleneck_forward.8} parent=0 // pred_fallthru
    _
  // Predicated region
  $region14: #{bottleneck_forward.8} parent=0 // pred_check
    _
  $region15: #{bottleneck_forward.8} parent=0 // pred_check_branch
    %17 = sbr.rel (0) target = $region17
  $region16: #{bottleneck_forward.8} parent=0 // pred_region
    _
  $region17: #{bottleneck_forward.8} parent=0 // pred_fallthru
    _
  // Predicated region
  $region18: #{bottleneck_forward.8} parent=0 // pred_check
    _
  $region19: #{bottleneck_forward.8} parent=0 // pred_check_branch
    %19 = sbr.rel (0) target = $region21
  $region20: #{bottleneck_forward.8} parent=0 // pred_region
    _
  $region21: #{bottleneck_forward.8} parent=0 // pred_fallthru
    _
  %v20 = vld [vmem:[%s0] sm:$0xff]
  %v21 = vld [vmem:[%s0 + $0x8] sm:$0xff]
  %v22 = vld [vmem:[%s0 + $0x10] sm:$0xff]
  %v23 = vld [vmem:[%s0 + $0x18] sm:$0xff]
  %v24 = vld [vmem:[%s0 + $0x20] sm:$0xff]
  %v25 = vld [vmem:[%s0 + $0x28] sm:$0xff]
  %v26 = vld [vmem:[%s0 + $0x30] sm:$0xff]
  %v27 = vld [vmem:[%s0 + $0x38] sm:$0xff]
  %v28 = vld [vmem:[%s0 + $0x40] sm:$0xff]
  %v29 = vld [vmem:[%s0 + $0x48] sm:$0xff]
  %v30 = vld [vmem:[%s0 + $0x50] sm:$0xff]
  %v31 = vld [vmem:[%s0 + $0x58] sm:$0xff]
  %v32 = vld [vmem:[%s0 + $0x60] sm:$0xff]
  %v33 = vld [vmem:[%s0 + $0x68] sm:$0xff]
  %v34 = vld [vmem:[%s0 + $0x70] sm:$0xff]
  %v35 = vld [vmem:[%s0 + $0x78] sm:$0xff]
  %v36 = vld [vmem:[%s0 + $0x80] sm:$0xff]
  %v37 = vld [vmem:[%s0 + $0x88] sm:$0xff]
  %v38 = vld [vmem:[%s0 + $0x90] sm:$0xff]
  %v39 = vld [vmem:[%s0 + $0x98] sm:$0xff]
  %v40 = vld [vmem:[%s0 + $0xa0] sm:$0xff]
  %v41 = vld [vmem:[%s0 + $0xa8] sm:$0xff]
  %v42 = vld [vmem:[%s0 + $0xb0] sm:$0xff]
  %v43 = vld [vmem:[%s0 + $0xb8] sm:$0xff]
  %v44 = vld [vmem:[%s0 + $0xc0] sm:$0xff]
  %v45 = vld [vmem:[%s0 + $0xc8] sm:$0xff]
  %v46 = vld [vmem:[%s0 + $0xd0] sm:$0xff]
  %v47 = vld [vmem:[%s0 + $0xd8] sm:$0xff]
  %v48 = vld [vmem:[%s0 + $0xe0] sm:$0xff]
  %v49 = vld [vmem:[%s0 + $0xe8] sm:$0xff]
  %v50 = vld [vmem:[%s0 + $0xf0] sm:$0xff]
  %v51 = vld [vmem:[%s0 + $0xf8] sm:$0xff]
  %v52 = vld [vmem:[%s0 + $0x100] sm:$0xff]
  %v53 = vld [vmem:[%s0 + $0x108] sm:$0xff]
  %v54 = vld [vmem:[%s0 + $0x110] sm:$0xff]
  %v55 = vld [vmem:[%s0 + $0x118] sm:$0xff]
  %v56 = vld [vmem:[%s0 + $0x120] sm:$0xff]
  %v57 = vld [vmem:[%s0 + $0x128] sm:$0xff]
  %v58 = vld [vmem:[%s0 + $0x130] sm:$0xff]
  %v59 = vld [vmem:[%s0 + $0x138] sm:$0xff]
  %v60 = vld [vmem:[%s0 + $0x140] sm:$0xff]
  %v61 = vld [vmem:[%s0 + $0x148] sm:$0xff]
  %v62 = vld [vmem:[%s0 + $0x150] sm:$0xff]
  %v63 = vld [vmem:[%s0 + $0x158] sm:$0xff]
  %v64 = vld [vmem:[%s0 + $0x160] sm:$0xff]
  %v65 = vld [vmem:[%s0 + $0x168] sm:$0xff]
  %v66 = vld [vmem:[%s0 + $0x170] sm:$0xff]
  %v67 = vld [vmem:[%s0 + $0x178] sm:$0xff]
  %v68 = vld [vmem:[%s0 + $0x180] sm:$0xff]
  %v69 = vld [vmem:[%s0 + $0x188] sm:$0xff]
  %v70 = vld [vmem:[%s0 + $0x190] sm:$0xff]
  %v71 = vld [vmem:[%s0 + $0x198] sm:$0xff]
  %v72 = vld [vmem:[%s0 + $0x1a0] sm:$0xff]
  %v73 = vld [vmem:[%s0 + $0x1a8] sm:$0xff]
  %v74 = vld [vmem:[%s0 + $0x1b0] sm:$0xff]
  %v75 = vld [vmem:[%s0 + $0x1b8] sm:$0xff]
  %v76 = vld [vmem:[%s0 + $0x1c0] sm:$0xff]
  %v77 = vld [vmem:[%s0 + $0x1c8] sm:$0xff]
  %v78 = vld [vmem:[%s0 + $0x1d0] sm:$0xff]
  %v79 = vld [vmem:[%s0 + $0x1d8] sm:$0xff]
  %v80 = vld [vmem:[%s0 + $0x1e0] sm:$0xff]
  %v81 = vld [vmem:[%s0 + $0x1e8] sm:$0xff]
  %v82 = vld [vmem:[%s0 + $0x1f0] sm:$0xff]
  %v83 = vld [vmem:[%s0 + $0x1f8] sm:$0xff]
  %v84 = vld [vmem:[%s1] sm:$0x1]
  %v85 = vld [vmem:[%s2] sm:$0x1]
  %v86 = vld [vmem:[%s3] sm:$0x1]
  %v87 = vld [vmem:[%s4] sm:$0x1]
  %v88 = vmul.f32 %v84, 0.001953125
  %v89 = vmul.f32 %v85, 0.001953125
  %v90 = vmul.f32 %v88, %v88
  %v91 = vsub.f32 %v89, %v90
  %v92 = vmax.f32 %v91, 0.0
  %v94 = vlaneseq
  %v95 = vshrl.u32 %v94, 7
  %v96 = vsub.s32 0, %v95
  %v97 = vrot.slane %v88, %v96
  %v99 = vsub.f32 %v20, %v97
  %v100 = vsub.f32 %v21, %v97
  %v101 = vsub.f32 %v22, %v97
  %v102 = vsub.f32 %v23, %v97
  %v103 = vsub.f32 %v24, %v97
  %v104 = vsub.f32 %v25, %v97
  %v105 = vsub.f32 %v26, %v97
  %v106 = vsub.f32 %v27, %v97
  %v107 = vsub.f32 %v28, %v97
  %v108 = vsub.f32 %v29, %v97
  %v109 = vsub.f32 %v30, %v97
  %v110 = vsub.f32 %v31, %v97
  %v111 = vsub.f32 %v32, %v97
  %v112 = vsub.f32 %v33, %v97
  %v113 = vsub.f32 %v34, %v97
  %v114 = vsub.f32 %v35, %v97
  %v115 = vsub.f32 %v36, %v97
  %v116 = vsub.f32 %v37, %v97
  %v117 = vsub.f32 %v38, %v97
  %v118 = vsub.f32 %v39, %v97
  %v119 = vsub.f32 %v40, %v97
  %v120 = vsub.f32 %v41, %v97
  %v121 = vsub.f32 %v42, %v97
  %v122 = vsub.f32 %v43, %v97
  %v123 = vsub.f32 %v44, %v97
  %v124 = vsub.f32 %v45, %v97
  %v125 = vsub.f32 %v46, %v97
  %v126 = vsub.f32 %v47, %v97
  %v127 = vsub.f32 %v48, %v97
  %v128 = vsub.f32 %v49, %v97
  %v129 = vsub.f32 %v50, %v97
  %v130 = vsub.f32 %v51, %v97
  %v131 = vsub.f32 %v52, %v97
  %v132 = vsub.f32 %v53, %v97
  %v133 = vsub.f32 %v54, %v97
  %v134 = vsub.f32 %v55, %v97
  %v135 = vsub.f32 %v56, %v97
  %v136 = vsub.f32 %v57, %v97
  %v137 = vsub.f32 %v58, %v97
  %v138 = vsub.f32 %v59, %v97
  %v139 = vsub.f32 %v60, %v97
  %v140 = vsub.f32 %v61, %v97
  %v141 = vsub.f32 %v62, %v97
  %v142 = vsub.f32 %v63, %v97
  %v143 = vsub.f32 %v64, %v97
  %v144 = vsub.f32 %v65, %v97
  %v145 = vsub.f32 %v66, %v97
  %v146 = vsub.f32 %v67, %v97
  %v147 = vsub.f32 %v68, %v97
  %v148 = vsub.f32 %v69, %v97
  %v149 = vsub.f32 %v70, %v97
  %v150 = vsub.f32 %v71, %v97
  %v151 = vsub.f32 %v72, %v97
  %v152 = vsub.f32 %v73, %v97
  %v153 = vsub.f32 %v74, %v97
  %v154 = vsub.f32 %v75, %v97
  %v155 = vsub.f32 %v76, %v97
  %v156 = vsub.f32 %v77, %v97
  %v157 = vsub.f32 %v78, %v97
  %v158 = vsub.f32 %v79, %v97
  %v159 = vsub.f32 %v80, %v97
  %v160 = vsub.f32 %v81, %v97
  %v161 = vsub.f32 %v82, %v97
  %v162 = vsub.f32 %v83, %v97
  %v163 = vadd.f32 %v92, 1e-05
  %v164 = vrsqrt.pop %v163
  %v165 = vmul.f32 %v164, %v86
  %v167 = vlaneseq
  %v168 = vshrl.u32 %v167, 7
  %v169 = vsub.s32 0, %v168
  %v170 = vrot.slane %v165, %v169
  %v172 = vmul.f32 %v99, %v170
  %v173 = vmul.f32 %v100, %v170
  %v174 = vmul.f32 %v101, %v170
  %v175 = vmul.f32 %v102, %v170
  %v176 = vmul.f32 %v103, %v170
  %v177 = vmul.f32 %v104, %v170
  %v178 = vmul.f32 %v105, %v170
  %v179 = vmul.f32 %v106, %v170
  %v180 = vmul.f32 %v107, %v170
  %v181 = vmul.f32 %v108, %v170
  %v182 = vmul.f32 %v109, %v170
  %v183 = vmul.f32 %v110, %v170
  %v184 = vmul.f32 %v111, %v170
  %v185 = vmul.f32 %v112, %v170
  %v186 = vmul.f32 %v113, %v170
  %v187 = vmul.f32 %v114, %v170
  %v188 = vmul.f32 %v115, %v170
  %v189 = vmul.f32 %v116, %v170
  %v190 = vmul.f32 %v117, %v170
  %v191 = vmul.f32 %v118, %v170
  %v192 = vmul.f32 %v119, %v170
  %v193 = vmul.f32 %v120, %v170
  %v194 = vmul.f32 %v121, %v170
  %v195 = vmul.f32 %v122, %v170
  %v196 = vmul.f32 %v123, %v170
  %v197 = vmul.f32 %v124, %v170
  %v198 = vmul.f32 %v125, %v170
  %v199 = vmul.f32 %v126, %v170
  %v200 = vmul.f32 %v127, %v170
  %v201 = vmul.f32 %v128, %v170
  %v202 = vmul.f32 %v129, %v170
  %v203 = vmul.f32 %v130, %v170
  %v204 = vmul.f32 %v131, %v170
  %v205 = vmul.f32 %v132, %v170
  %v206 = vmul.f32 %v133, %v170
  %v207 = vmul.f32 %v134, %v170
  %v208 = vmul.f32 %v135, %v170
  %v209 = vmul.f32 %v136, %v170
  %v210 = vmul.f32 %v137, %v170
  %v211 = vmul.f32 %v138, %v170
  %v212 = vmul.f32 %v139, %v170
  %v213 = vmul.f32 %v140, %v170
  %v214 = vmul.f32 %v141, %v170
  %v215 = vmul.f32 %v142, %v170
  %v216 = vmul.f32 %v143, %v170
  %v217 = vmul.f32 %v144, %v170
  %v218 = vmul.f32 %v145, %v170
  %v219 = vmul.f32 %v146, %v170
  %v220 = vmul.f32 %v147, %v170
  %v221 = vmul.f32 %v148, %v170
  %v222 = vmul.f32 %v149, %v170
  %v223 = vmul.f32 %v150, %v170
  %v224 = vmul.f32 %v151, %v170
  %v225 = vmul.f32 %v152, %v170
  %v226 = vmul.f32 %v153, %v170
  %v227 = vmul.f32 %v154, %v170
  %v228 = vmul.f32 %v155, %v170
  %v229 = vmul.f32 %v156, %v170
  %v230 = vmul.f32 %v157, %v170
  %v231 = vmul.f32 %v158, %v170
  %v232 = vmul.f32 %v159, %v170
  %v233 = vmul.f32 %v160, %v170
  %v234 = vmul.f32 %v161, %v170
  %v235 = vmul.f32 %v162, %v170
  %v237 = vlaneseq
  %v238 = vshrl.u32 %v237, 7
  %v239 = vsub.s32 0, %v238
  %v240 = vrot.slane %v87, %v239
  %v242 = vadd.f32 %v172, %v240
  %v243 = vadd.f32 %v173, %v240
  %v244 = vadd.f32 %v174, %v240
  %v245 = vadd.f32 %v175, %v240
  %v246 = vadd.f32 %v176, %v240
  %v247 = vadd.f32 %v177, %v240
  %v248 = vadd.f32 %v178, %v240
  %v249 = vadd.f32 %v179, %v240
  %v250 = vadd.f32 %v180, %v240
  %v251 = vadd.f32 %v181, %v240
  %v252 = vadd.f32 %v182, %v240
  %v253 = vadd.f32 %v183, %v240
  %v254 = vadd.f32 %v184, %v240
  %v255 = vadd.f32 %v185, %v240
  %v256 = vadd.f32 %v186, %v240
  %v257 = vadd.f32 %v187, %v240
  %v258 = vadd.f32 %v188, %v240
  %v259 = vadd.f32 %v189, %v240
  %v260 = vadd.f32 %v190, %v240
  %v261 = vadd.f32 %v191, %v240
  %v262 = vadd.f32 %v192, %v240
  %v263 = vadd.f32 %v193, %v240
  %v264 = vadd.f32 %v194, %v240
  %v265 = vadd.f32 %v195, %v240
  %v266 = vadd.f32 %v196, %v240
  %v267 = vadd.f32 %v197, %v240
  %v268 = vadd.f32 %v198, %v240
  %v269 = vadd.f32 %v199, %v240
  %v270 = vadd.f32 %v200, %v240
  %v271 = vadd.f32 %v201, %v240
  %v272 = vadd.f32 %v202, %v240
  %v273 = vadd.f32 %v203, %v240
  %v274 = vadd.f32 %v204, %v240
  %v275 = vadd.f32 %v205, %v240
  %v276 = vadd.f32 %v206, %v240
  %v277 = vadd.f32 %v207, %v240
  %v278 = vadd.f32 %v208, %v240
  %v279 = vadd.f32 %v209, %v240
  %v280 = vadd.f32 %v210, %v240
  %v281 = vadd.f32 %v211, %v240
  %v282 = vadd.f32 %v212, %v240
  %v283 = vadd.f32 %v213, %v240
  %v284 = vadd.f32 %v214, %v240
  %v285 = vadd.f32 %v215, %v240
  %v286 = vadd.f32 %v216, %v240
  %v287 = vadd.f32 %v217, %v240
  %v288 = vadd.f32 %v218, %v240
  %v289 = vadd.f32 %v219, %v240
  %v290 = vadd.f32 %v220, %v240
  %v291 = vadd.f32 %v221, %v240
  %v292 = vadd.f32 %v222, %v240
  %v293 = vadd.f32 %v223, %v240
  %v294 = vadd.f32 %v224, %v240
  %v295 = vadd.f32 %v225, %v240
  %v296 = vadd.f32 %v226, %v240
  %v297 = vadd.f32 %v227, %v240
  %v298 = vadd.f32 %v228, %v240
  %v299 = vadd.f32 %v229, %v240
  %v300 = vadd.f32 %v230, %v240
  %v301 = vadd.f32 %v231, %v240
  %v302 = vadd.f32 %v232, %v240
  %v303 = vadd.f32 %v233, %v240
  %v304 = vadd.f32 %v234, %v240
  %v305 = vadd.f32 %v235, %v240
  %v306 = vmax.f32 %v242, 0.0
  %v307 = vmax.f32 %v243, 0.0
  %v308 = vmax.f32 %v244, 0.0
  %v309 = vmax.f32 %v245, 0.0
  %v310 = vmax.f32 %v246, 0.0
  %v311 = vmax.f32 %v247, 0.0
  %v312 = vmax.f32 %v248, 0.0
  %v313 = vmax.f32 %v249, 0.0
  %v314 = vmax.f32 %v250, 0.0
  %v315 = vmax.f32 %v251, 0.0
  %v316 = vmax.f32 %v252, 0.0
  %v317 = vmax.f32 %v253, 0.0
  %v318 = vmax.f32 %v254, 0.0
  %v319 = vmax.f32 %v255, 0.0
  %v320 = vmax.f32 %v256, 0.0
  %v321 = vmax.f32 %v257, 0.0
  %v322 = vmax.f32 %v258, 0.0
  %v323 = vmax.f32 %v259, 0.0
  %v324 = vmax.f32 %v260, 0.0
  %v325 = vmax.f32 %v261, 0.0
  %v326 = vmax.f32 %v262, 0.0
  %v327 = vmax.f32 %v263, 0.0
  %v328 = vmax.f32 %v264, 0.0
  %v329 = vmax.f32 %v265, 0.0
  %v330 = vmax.f32 %v266, 0.0
  %v331 = vmax.f32 %v267, 0.0
  %v332 = vmax.f32 %v268, 0.0
  %v333 = vmax.f32 %v269, 0.0
  %v334 = vmax.f32 %v270, 0.0
  %v335 = vmax.f32 %v271, 0.0
  %v336 = vmax.f32 %v272, 0.0
  %v337 = vmax.f32 %v273, 0.0
  %v338 = vmax.f32 %v274, 0.0
  %v339 = vmax.f32 %v275, 0.0
  %v340 = vmax.f32 %v276, 0.0
  %v341 = vmax.f32 %v277, 0.0
  %v342 = vmax.f32 %v278, 0.0
  %v343 = vmax.f32 %v279, 0.0
  %v344 = vmax.f32 %v280, 0.0
  %v345 = vmax.f32 %v281, 0.0
  %v346 = vmax.f32 %v282, 0.0
  %v347 = vmax.f32 %v283, 0.0
  %v348 = vmax.f32 %v284, 0.0
  %v349 = vmax.f32 %v285, 0.0
  %v350 = vmax.f32 %v286, 0.0
  %v351 = vmax.f32 %v287, 0.0
  %v352 = vmax.f32 %v288, 0.0
  %v353 = vmax.f32 %v289, 0.0
  %v354 = vmax.f32 %v290, 0.0
  %v355 = vmax.f32 %v291, 0.0
  %v356 = vmax.f32 %v292, 0.0
  %v357 = vmax.f32 %v293, 0.0
  %v358 = vmax.f32 %v294, 0.0
  %v359 = vmax.f32 %v295, 0.0
  %v360 = vmax.f32 %v296, 0.0
  %v361 = vmax.f32 %v297, 0.0
  %v362 = vmax.f32 %v298, 0.0
  %v363 = vmax.f32 %v299, 0.0
  %v364 = vmax.f32 %v300, 0.0
  %v365 = vmax.f32 %v301, 0.0
  %v366 = vmax.f32 %v302, 0.0
  %v367 = vmax.f32 %v303, 0.0
  %v368 = vmax.f32 %v304, 0.0
  %v369 = vmax.f32 %v305, 0.0
  %370 = vst [vmem:[%s5] sm:$0xff] %v306
  %371 = vst [vmem:[%s5 + $0x8] sm:$0xff] %v307
  %372 = vst [vmem:[%s5 + $0x10] sm:$0xff] %v308
  %373 = vst [vmem:[%s5 + $0x18] sm:$0xff] %v309
  %374 = vst [vmem:[%s5 + $0x20] sm:$0xff] %v310
  %375 = vst [vmem:[%s5 + $0x28] sm:$0xff] %v311
  %376 = vst [vmem:[%s5 + $0x30] sm:$0xff] %v312
  %377 = vst [vmem:[%s5 + $0x38] sm:$0xff] %v313
  %378 = vst [vmem:[%s5 + $0x40] sm:$0xff] %v314
  %379 = vst [vmem:[%s5 + $0x48] sm:$0xff] %v315
  %380 = vst [vmem:[%s5 + $0x50] sm:$0xff] %v316
  %381 = vst [vmem:[%s5 + $0x58] sm:$0xff] %v317
  %382 = vst [vmem:[%s5 + $0x60] sm:$0xff] %v318
  %383 = vst [vmem:[%s5 + $0x68] sm:$0xff] %v319
  %384 = vst [vmem:[%s5 + $0x70] sm:$0xff] %v320
  %385 = vst [vmem:[%s5 + $0x78] sm:$0xff] %v321
  %386 = vst [vmem:[%s5 + $0x80] sm:$0xff] %v322
  %387 = vst [vmem:[%s5 + $0x88] sm:$0xff] %v323
  %388 = vst [vmem:[%s5 + $0x90] sm:$0xff] %v324
  %389 = vst [vmem:[%s5 + $0x98] sm:$0xff] %v325
  %390 = vst [vmem:[%s5 + $0xa0] sm:$0xff] %v326
  %391 = vst [vmem:[%s5 + $0xa8] sm:$0xff] %v327
  %392 = vst [vmem:[%s5 + $0xb0] sm:$0xff] %v328
  %393 = vst [vmem:[%s5 + $0xb8] sm:$0xff] %v329
  %394 = vst [vmem:[%s5 + $0xc0] sm:$0xff] %v330
  %395 = vst [vmem:[%s5 + $0xc8] sm:$0xff] %v331
  %396 = vst [vmem:[%s5 + $0xd0] sm:$0xff] %v332
  %397 = vst [vmem:[%s5 + $0xd8] sm:$0xff] %v333
  %398 = vst [vmem:[%s5 + $0xe0] sm:$0xff] %v334
  %399 = vst [vmem:[%s5 + $0xe8] sm:$0xff] %v335
  %400 = vst [vmem:[%s5 + $0xf0] sm:$0xff] %v336
  %401 = vst [vmem:[%s5 + $0xf8] sm:$0xff] %v337
  %402 = vst [vmem:[%s5 + $0x100] sm:$0xff] %v338
  %403 = vst [vmem:[%s5 + $0x108] sm:$0xff] %v339
  %404 = vst [vmem:[%s5 + $0x110] sm:$0xff] %v340
  %405 = vst [vmem:[%s5 + $0x118] sm:$0xff] %v341
  %406 = vst [vmem:[%s5 + $0x120] sm:$0xff] %v342
  %407 = vst [vmem:[%s5 + $0x128] sm:$0xff] %v343
  %408 = vst [vmem:[%s5 + $0x130] sm:$0xff] %v344
  %409 = vst [vmem:[%s5 + $0x138] sm:$0xff] %v345
  %410 = vst [vmem:[%s5 + $0x140] sm:$0xff] %v346
  %411 = vst [vmem:[%s5 + $0x148] sm:$0xff] %v347
  %412 = vst [vmem:[%s5 + $0x150] sm:$0xff] %v348
  %413 = vst [vmem:[%s5 + $0x158] sm:$0xff] %v349
  %414 = vst [vmem:[%s5 + $0x160] sm:$0xff] %v350
  %415 = vst [vmem:[%s5 + $0x168] sm:$0xff] %v351
  %416 = vst [vmem:[%s5 + $0x170] sm:$0xff] %v352
  %417 = vst [vmem:[%s5 + $0x178] sm:$0xff] %v353
  %418 = vst [vmem:[%s5 + $0x180] sm:$0xff] %v354
  %419 = vst [vmem:[%s5 + $0x188] sm:$0xff] %v355
  %420 = vst [vmem:[%s5 + $0x190] sm:$0xff] %v356
  %421 = vst [vmem:[%s5 + $0x198] sm:$0xff] %v357
  %422 = vst [vmem:[%s5 + $0x1a0] sm:$0xff] %v358
  %423 = vst [vmem:[%s5 + $0x1a8] sm:$0xff] %v359
  %424 = vst [vmem:[%s5 + $0x1b0] sm:$0xff] %v360
  %425 = vst [vmem:[%s5 + $0x1b8] sm:$0xff] %v361
  %426 = vst [vmem:[%s5 + $0x1c0] sm:$0xff] %v362
  %427 = vst [vmem:[%s5 + $0x1c8] sm:$0xff] %v363
  %428 = vst [vmem:[%s5 + $0x1d0] sm:$0xff] %v364
  %429 = vst [vmem:[%s5 + $0x1d8] sm:$0xff] %v365
  %430 = vst [vmem:[%s5 + $0x1e0] sm:$0xff] %v366
  %431 = vst [vmem:[%s5 + $0x1e8] sm:$0xff] %v367
  %432 = vst [vmem:[%s5 + $0x1f0] sm:$0xff] %v368
  %433 = vst [vmem:[%s5 + $0x1f8] sm:$0xff] %v369
  // Predicated region
  $region22: #{bottleneck_forward.8} parent=0 // pred_check
    _
  $region23: #{bottleneck_forward.8} parent=0 // pred_check_branch
    %435 = sbr.rel (0) target = $region25
  $region24: #{bottleneck_forward.8} parent=0 // pred_region
    _
  $region25: #{bottleneck_forward.8} parent=0 // pred_fallthru
    _
  // Predicated region
  $region26: #{bottleneck_forward.8} parent=0 // pred_check
    _
  $region27: #{bottleneck_forward.8} parent=0 // pred_check_branch
    %437 = sbr.rel (0) target = $region29
  $region28: #{bottleneck_forward.8} parent=0 // pred_region
    _
  $region29: #{bottleneck_forward.8} parent=0 // pred_fallthru
    _

// kernel: bottleneck_forward.7
$region0: #{bottleneck_forward.7}
  #allocation0 [shape = 'u32[]', space=smem, size = 0x4, offset = 0x4, fixed_abs, tag = 'smem constant byte address 0x4 - core index']
  #allocation1 [shape = 'u32[144,128]{1,0:T(1,128)}', space=vmem, size = 0x12000, scoped, tag = 'internal scratch']
  %s0 = inlined_call_operand.vmem [shape: bf16[512,128], index: 0, kind: input, shape index: {}]
  %s1 = inlined_call_operand.vmem [shape: bf16[128,128], index: 1, kind: input, shape index: {}]
  %s2 = inlined_call_operand.vmem [shape: f32[512,128], index: 2, kind: output, shape index: {0}]
  %s3 = inlined_call_operand.vmem [shape: f32[1,128], index: 3, kind: output, shape index: {1}]
  %s4 = inlined_call_operand.vmem [shape: f32[1,128], index: 4, kind: output, shape index: {2}]
  %5 = xla_tuple %s2, %s3, %s4
  %s6 = sld [smem:[#allocation0]]
  $region38: #{bottleneck_forward.7} parent=0
    _
  %s8 = ssub.s32 1, %s6
  %s9 = scalar_select 0, %s8, %s6
  // Predicated region
  $region2: #{bottleneck_forward.7} parent=0 // pred_check
    _
  $region3: #{bottleneck_forward.7} parent=0 // pred_check_branch
    %11 = sbr.rel (0) target = $region5
  $region4: #{bottleneck_forward.7} parent=0 // pred_region
    _
  $region5: #{bottleneck_forward.7} parent=0 // pred_fallthru
    _
  // Predicated region
  $region6: #{bottleneck_forward.7} parent=0 // pred_check
    _
  $region7: #{bottleneck_forward.7} parent=0 // pred_check_branch
    %13 = sbr.rel (0) target = $region9
  $region8: #{bottleneck_forward.7} parent=0 // pred_region
    _
  $region9: #{bottleneck_forward.7} parent=0 // pred_fallthru
    _
  %p15 = scmp.eq.s32.totalorder 0, 0
  // Predicated region
  $region10: #{bottleneck_forward.7} parent=0 // pred_check
    %p16 = pneg %p15
  $region11: #{bottleneck_forward.7} parent=0 // pred_check_branch
    %18 = sbr.rel (%p16) target = $region13
  $region12: #{bottleneck_forward.7} parent=0 // pred_region
    %19 = vst [vmem:[%s3] sm:$0x1] 0.0
    %20 = vst [vmem:[%s4] sm:$0x1] 0.0
  $region13: #{bottleneck_forward.7} parent=0 // pred_fallthru
    _
  %v21 = vld [vmem:[%s0] sm:$0xf]
  %v22 = vld [vmem:[%s0 + $0x4] sm:$0xf]
  %v23 = vld [vmem:[%s0 + $0x8] sm:$0xf]
  %v24 = vld [vmem:[%s0 + $0xc] sm:$0xf]
  %v25 = vld [vmem:[%s0 + $0x10] sm:$0xf]
  %v26 = vld [vmem:[%s0 + $0x14] sm:$0xf]
  %v27 = vld [vmem:[%s0 + $0x18] sm:$0xf]
  %v28 = vld [vmem:[%s0 + $0x1c] sm:$0xf]
  %v29 = vld [vmem:[%s0 + $0x20] sm:$0xf]
  %v30 = vld [vmem:[%s0 + $0x24] sm:$0xf]
  %v31 = vld [vmem:[%s0 + $0x28] sm:$0xf]
  %v32 = vld [vmem:[%s0 + $0x2c] sm:$0xf]
  %v33 = vld [vmem:[%s0 + $0x30] sm:$0xf]
  %v34 = vld [vmem:[%s0 + $0x34] sm:$0xf]
  %v35 = vld [vmem:[%s0 + $0x38] sm:$0xf]
  %v36 = vld [vmem:[%s0 + $0x3c] sm:$0xf]
  %v37 = vld [vmem:[%s0 + $0x40] sm:$0xf]
  %v38 = vld [vmem:[%s0 + $0x44] sm:$0xf]
  %v39 = vld [vmem:[%s0 + $0x48] sm:$0xf]
  %v40 = vld [vmem:[%s0 + $0x4c] sm:$0xf]
  %v41 = vld [vmem:[%s0 + $0x50] sm:$0xf]
  %v42 = vld [vmem:[%s0 + $0x54] sm:$0xf]
  %v43 = vld [vmem:[%s0 + $0x58] sm:$0xf]
  %v44 = vld [vmem:[%s0 + $0x5c] sm:$0xf]
  %v45 = vld [vmem:[%s0 + $0x60] sm:$0xf]
  %v46 = vld [vmem:[%s0 + $0x64] sm:$0xf]
  %v47 = vld [vmem:[%s0 + $0x68] sm:$0xf]
  %v48 = vld [vmem:[%s0 + $0x6c] sm:$0xf]
  %v49 = vld [vmem:[%s0 + $0x70] sm:$0xf]
  %v50 = vld [vmem:[%s0 + $0x74] sm:$0xf]
  %v51 = vld [vmem:[%s0 + $0x78] sm:$0xf]
  %v52 = vld [vmem:[%s0 + $0x7c] sm:$0xf]
  %v53 = vld [vmem:[%s0 + $0x80] sm:$0xf]
  %v54 = vld [vmem:[%s0 + $0x84] sm:$0xf]
  %v55 = vld [vmem:[%s0 + $0x88] sm:$0xf]
  %v56 = vld [vmem:[%s0 + $0x8c] sm:$0xf]
  %v57 = vld [vmem:[%s0 + $0x90] sm:$0xf]
  %v58 = vld [vmem:[%s0 + $0x94] sm:$0xf]
  %v59 = vld [vmem:[%s0 + $0x98] sm:$0xf]
  %v60 = vld [vmem:[%s0 + $0x9c] sm:$0xf]
  %v61 = vld [vmem:[%s0 + $0xa0] sm:$0xf]
  %v62 = vld [vmem:[%s0 + $0xa4] sm:$0xf]
  %v63 = vld [vmem:[%s0 + $0xa8] sm:$0xf]
  %v64 = vld [vmem:[%s0 + $0xac] sm:$0xf]
  %v65 = vld [vmem:[%s0 + $0xb0] sm:$0xf]
  %v66 = vld [vmem:[%s0 + $0xb4] sm:$0xf]
  %v67 = vld [vmem:[%s0 + $0xb8] sm:$0xf]
  %v68 = vld [vmem:[%s0 + $0xbc] sm:$0xf]
  %v69 = vld [vmem:[%s0 + $0xc0] sm:$0xf]
  %v70 = vld [vmem:[%s0 + $0xc4] sm:$0xf]
  %v71 = vld [vmem:[%s0 + $0xc8] sm:$0xf]
  %v72 = vld [vmem:[%s0 + $0xcc] sm:$0xf]
  %v73 = vld [vmem:[%s0 + $0xd0] sm:$0xf]
  %v74 = vld [vmem:[%s0 + $0xd4] sm:$0xf]
  %v75 = vld [vmem:[%s0 + $0xd8] sm:$0xf]
  %v76 = vld [vmem:[%s0 + $0xdc] sm:$0xf]
  %v77 = vld [vmem:[%s0 + $0xe0] sm:$0xf]
  %v78 = vld [vmem:[%s0 + $0xe4] sm:$0xf]
  %v79 = vld [vmem:[%s0 + $0xe8] sm:$0xf]
  %v80 = vld [vmem:[%s0 + $0xec] sm:$0xf]
  %v81 = vld [vmem:[%s0 + $0xf0] sm:$0xf]
  %v82 = vld [vmem:[%s0 + $0xf4] sm:$0xf]
  %v83 = vld [vmem:[%s0 + $0xf8] sm:$0xf]
  %v84 = vld [vmem:[%s0 + $0xfc] sm:$0xf]
  %v85 = vld [vmem:[%s1] sm:$0xf]
  %v86 = vld [vmem:[%s1 + $0x4] sm:$0xf]
  %v87 = vld [vmem:[%s1 + $0x8] sm:$0xf]
  %v88 = vld [vmem:[%s1 + $0xc] sm:$0xf]
  %v89 = vld [vmem:[%s1 + $0x10] sm:$0xf]
  %v90 = vld [vmem:[%s1 + $0x14] sm:$0xf]
  %v91 = vld [vmem:[%s1 + $0x18] sm:$0xf]
  %v92 = vld [vmem:[%s1 + $0x1c] sm:$0xf]
  %v93 = vld [vmem:[%s1 + $0x20] sm:$0xf]
  %v94 = vld [vmem:[%s1 + $0x24] sm:$0xf]
  %v95 = vld [vmem:[%s1 + $0x28] sm:$0xf]
  %v96 = vld [vmem:[%s1 + $0x2c] sm:$0xf]
  %v97 = vld [vmem:[%s1 + $0x30] sm:$0xf]
  %v98 = vld [vmem:[%s1 + $0x34] sm:$0xf]
  %v99 = vld [vmem:[%s1 + $0x38] sm:$0xf]
  %v100 = vld [vmem:[%s1 + $0x3c] sm:$0xf]
  %v165 = vunpack.c.l.b16 %v21
  %v166 = vunpack.c.l.b16 %v22
  %v167 = vunpack.c.l.b16 %v23
  %v168 = vunpack.c.l.b16 %v24
  %v169 = vunpack.c.l.b16 %v25
  %v170 = vunpack.c.l.b16 %v26
  %v171 = vunpack.c.l.b16 %v27
  %v172 = vunpack.c.l.b16 %v28
  %v173 = vunpack.c.l.b16 %v29
  %v174 = vunpack.c.l.b16 %v30
  %v175 = vunpack.c.l.b16 %v31
  %v176 = vunpack.c.l.b16 %v32
  %v177 = vunpack.c.l.b16 %v33
  %v178 = vunpack.c.l.b16 %v34
  %v179 = vunpack.c.l.b16 %v35
  %v180 = vunpack.c.l.b16 %v36
  %v181 = vunpack.c.l.b16 %v37
  %v182 = vunpack.c.l.b16 %v38
  %v183 = vunpack.c.l.b16 %v39
  %v184 = vunpack.c.l.b16 %v40
  %v185 = vunpack.c.l.b16 %v41
  %v186 = vunpack.c.l.b16 %v42
  %v187 = vunpack.c.l.b16 %v43
  %v188 = vunpack.c.l.b16 %v44
  %v189 = vunpack.c.l.b16 %v45
  %v190 = vunpack.c.l.b16 %v46
  %v191 = vunpack.c.l.b16 %v47
  %v192 = vunpack.c.l.b16 %v48
  %v193 = vunpack.c.l.b16 %v49
  %v194 = vunpack.c.l.b16 %v50
  %v195 = vunpack.c.l.b16 %v51
  %v196 = vunpack.c.l.b16 %v52
  %v197 = vunpack.c.l.b16 %v53
  %v198 = vunpack.c.l.b16 %v54
  %v199 = vunpack.c.l.b16 %v55
  %v200 = vunpack.c.l.b16 %v56
  %v201 = vunpack.c.l.b16 %v57
  %v202 = vunpack.c.l.b16 %v58
  %v203 = vunpack.c.l.b16 %v59
  %v204 = vunpack.c.l.b16 %v60
  %v205 = vunpack.c.l.b16 %v61
  %v206 = vunpack.c.l.b16 %v62
  %v207 = vunpack.c.l.b16 %v63
  %v208 = vunpack.c.l.b16 %v64
  %v209 = vunpack.c.l.b16 %v65
  %v210 = vunpack.c.l.b16 %v66
  %v211 = vunpack.c.l.b16 %v67
  %v212 = vunpack.c.l.b16 %v68
  %v213 = vunpack.c.l.b16 %v69
  %v214 = vunpack.c.l.b16 %v70
  %v215 = vunpack.c.l.b16 %v71
  %v216 = vunpack.c.l.b16 %v72
  %v217 = vunpack.c.l.b16 %v73
  %v218 = vunpack.c.l.b16 %v74
  %v219 = vunpack.c.l.b16 %v75
  %v220 = vunpack.c.l.b16 %v76
  %v221 = vunpack.c.l.b16 %v77
  %v222 = vunpack.c.l.b16 %v78
  %v223 = vunpack.c.l.b16 %v79
  %v224 = vunpack.c.l.b16 %v80
  %v225 = vunpack.c.l.b16 %v81
  %v226 = vunpack.c.l.b16 %v82
  %v227 = vunpack.c.l.b16 %v83
  %v228 = vunpack.c.l.b16 %v84
  %v229 = vpack.c.b16 %v166, %v165
  %v230 = vpack.c.b16 %v168, %v167
  %v231 = vpack.c.b16 %v170, %v169
  %v232 = vpack.c.b16 %v172, %v171
  %v233 = vpack.c.b16 %v174, %v173
  %v234 = vpack.c.b16 %v176, %v175
  %v235 = vpack.c.b16 %v178, %v177
  %v236 = vpack.c.b16 %v180, %v179
  %v237 = vpack.c.b16 %v182, %v181
  %v238 = vpack.c.b16 %v184, %v183
  %v239 = vpack.c.b16 %v186, %v185
  %v240 = vpack.c.b16 %v188, %v187
  %v241 = vpack.c.b16 %v190, %v189
  %v242 = vpack.c.b16 %v192, %v191
  %v243 = vpack.c.b16 %v194, %v193
  %v244 = vpack.c.b16 %v196, %v195
  %v245 = vpack.c.b16 %v198, %v197
  %v246 = vpack.c.b16 %v200, %v199
  %v247 = vpack.c.b16 %v202, %v201
  %v248 = vpack.c.b16 %v204, %v203
  %v249 = vpack.c.b16 %v206, %v205
  %v250 = vpack.c.b16 %v208, %v207
  %v251 = vpack.c.b16 %v210, %v209
  %v252 = vpack.c.b16 %v212, %v211
  %v253 = vpack.c.b16 %v214, %v213
  %v254 = vpack.c.b16 %v216, %v215
  %v255 = vpack.c.b16 %v218, %v217
  %v256 = vpack.c.b16 %v220, %v219
  %v257 = vpack.c.b16 %v222, %v221
  %v258 = vpack.c.b16 %v224, %v223
  %v259 = vpack.c.b16 %v226, %v225
  %v260 = vpack.c.b16 %v228, %v227
  %v309 = vunpack.c.l.b16 %v85
  %v310 = vunpack.c.l.b16 %v86
  %v311 = vunpack.c.l.b16 %v87
  %v312 = vunpack.c.l.b16 %v88
  %v313 = vunpack.c.l.b16 %v89
  %v314 = vunpack.c.l.b16 %v90
  %v315 = vunpack.c.l.b16 %v91
  %v316 = vunpack.c.l.b16 %v92
  %v317 = vunpack.c.l.b16 %v93
  %v318 = vunpack.c.l.b16 %v94
  %v319 = vunpack.c.l.b16 %v95
  %v320 = vunpack.c.l.b16 %v96
  %v321 = vunpack.c.l.b16 %v97
  %v322 = vunpack.c.l.b16 %v98
  %v323 = vunpack.c.l.b16 %v99
  %v324 = vunpack.c.l.b16 %v100
  %v325 = vpack.c.b16 %v310, %v309
  %v326 = vpack.c.b16 %v312, %v311
  %v327 = vpack.c.b16 %v314, %v313
  %v328 = vpack.c.b16 %v316, %v315
  %v329 = vpack.c.b16 %v318, %v317
  %v330 = vpack.c.b16 %v320, %v319
  %v331 = vpack.c.b16 %v322, %v321
  %v332 = vpack.c.b16 %v324, %v323
  %341 = vmatprep.subr.bf16.mxu0 0
  %342 = vmatpush1.bf16.msra.mxu0 %v325
  %343 = vmatprep.subr.bf16.mxu0 0
  %344 = vmatpush1.bf16.msra.mxu0 %v326
  %345 = vmatprep.subr.bf16.mxu0 0
  %346 = vmatpush1.bf16.msra.mxu0 %v327
  %347 = vmatprep.subr.bf16.mxu0 0
  %348 = vmatpush1.bf16.msra.mxu0 %v328
  %349 = vmatprep.subr.bf16.mxu0 0
  %350 = vmatpush1.bf16.msra.mxu0 %v329
  %351 = vmatprep.subr.bf16.mxu0 0
  %352 = vmatpush1.bf16.msra.mxu0 %v330
  %353 = vmatprep.subr.bf16.mxu0 0
  %354 = vmatpush1.bf16.msra.mxu0 %v331
  %355 = vmatprep.subr.bf16.mxu0 0
  %356 = vmatpush1.bf16.msra.mxu0 %v332
  %357 = vmatprep.subr.bf16.mxu0 0
  %358 = vmatpush1.bf16.msra.mxu0 0
  %359 = vmatprep.subr.bf16.mxu0 0
  %360 = vmatpush1.bf16.msra.mxu0 0
  %361 = vmatprep.subr.bf16.mxu0 0
  %362 = vmatpush1.bf16.msra.mxu0 0
  %363 = vmatprep.subr.bf16.mxu0 0
  %364 = vmatpush1.bf16.msra.mxu0 0
  %365 = vmatprep.subr.bf16.mxu0 0
  %366 = vmatpush1.bf16.msra.mxu0 0
  %367 = vmatprep.subr.bf16.mxu0 0
  %368 = vmatpush1.bf16.msra.mxu0 0
  %369 = vmatprep.subr.bf16.mxu0 0
  %370 = vmatpush1.bf16.msra.mxu0 0
  %371 = vmatprep.subr.bf16.mxu0 0
  %372 = vmatpush1.bf16.msra.mxu0 0
  %373 = vmatprep.mubr.bf16.mxu0 0
  %374 = vmatmul.mubr.bf16.gmra.mrb[0].mxu0 %v229
  %v375 = vpop.f32.mrb[0].mxu0
  %v376 = vadd.f32 0.0, %v375
  %v377 = vpop.f32.mrb[0].mxu0
  %v378 = vpop.f32.mrb[0].mxu0
  %v379 = vadd.f32 0.0, %v378
  %v380 = vpop.f32.mrb[0].mxu0
  %381 = vmatprep.mubr.bf16.mxu0 0
  %382 = vmatmul.mubr.bf16.gmra.mrb[0].mxu0 %v230
  %v383 = vpop.f32.mrb[0].mxu0
  %v384 = vadd.f32 0.0, %v383
  %v385 = vpop.f32.mrb[0].mxu0
  %v386 = vpop.f32.mrb[0].mxu0
  %v387 = vadd.f32 0.0, %v386
  %v388 = vpop.f32.mrb[0].mxu0
  %389 = vmatprep.mubr.bf16.mxu0 0
  %390 = vmatmul.mubr.bf16.gmra.mrb[0].mxu0 %v231
  %v391 = vpop.f32.mrb[0].mxu0
  %v392 = vadd.f32 0.0, %v391
  %v393 = vpop.f32.mrb[0].mxu0
  %v394 = vpop.f32.mrb[0].mxu0
  %v395 = vadd.f32 0.0, %v394
  %v396 = vpop.f32.mrb[0].mxu0
  %397 = vmatprep.mubr.bf16.mxu0 0
  %398 = vmatmul.mubr.bf16.gmra.mrb[0].mxu0 %v232
  %v399 = vpop.f32.mrb[0].mxu0
  %v400 = vadd.f32 0.0, %v399
  %v401 = vpop.f32.mrb[0].mxu0
  %v402 = vpop.f32.mrb[0].mxu0
  %v403 = vadd.f32 0.0, %v402
  %v404 = vpop.f32.mrb[0].mxu0
  %405 = vmatprep.mubr.bf16.mxu0 0
  %406 = vmatmul.mubr.bf16.gmra.mrb[0].mxu0 %v233
  %v407 = vpop.f32.mrb[0].mxu0
  %v408 = vadd.f32 0.0, %v407
  %v409 = vpop.f32.mrb[0].mxu0
  %v410 = vpop.f32.mrb[0].mxu0
  %v411 = vadd.f32 0.0, %v410
  %v412 = vpop.f32.mrb[0].mxu0
  %413 = vmatprep.mubr.bf16.mxu0 0
  %414 = vmatmul.mubr.bf16.gmra.mrb[0].mxu0 %v234
  %v415 = vpop.f32.mrb[0].mxu0
  %v416 = vadd.f32 0.0, %v415
  %v417 = vpop.f32.mrb[0].mxu0
  %v418 = vpop.f32.mrb[0].mxu0
  %v419 = vadd.f32 0.0, %v418
  %v420 = vpop.f32.mrb[0].mxu0
  %421 = vmatprep.mubr.bf16.mxu0 0
  %422 = vmatmul.mubr.bf16.gmra.mrb[0].mxu0 %v235
  %v423 = vpop.f32.mrb[0].mxu0
  %v424 = vadd.f32 0.0, %v423
  %v425 = vpop.f32.mrb[0].mxu0
  %v426 = vpop.f32.mrb[0].mxu0
  %v427 = vadd.f32 0.0, %v426
  %v428 = vpop.f32.mrb[0].mxu0
  %429 = vmatprep.mubr.bf16.mxu0 0
  %430 = vmatmul.mubr.bf16.gmra.mrb[0].mxu0 %v236
  %v431 = vpop.f32.mrb[0].mxu0
  %v432 = vadd.f32 0.0, %v431
  %v433 = vpop.f32.mrb[0].mxu0
  %v434 = vpop.f32.mrb[0].mxu0
  %v435 = vadd.f32 0.0, %v434
  %v436 = vpop.f32.mrb[0].mxu0
  %437 = vmatprep.mubr.bf16.mxu0 0
  %438 = vmatmul.mubr.bf16.gmra.mrb[0].mxu0 %v237
  %v439 = vpop.f32.mrb[0].mxu0
  %v440 = vadd.f32 0.0, %v439
  %v441 = vpop.f32.mrb[0].mxu0
  %v442 = vpop.f32.mrb[0].mxu0
  %v443 = vadd.f32 0.0, %v442
  %v444 = vpop.f32.mrb[0].mxu0
  %445 = vmatprep.mubr.bf16.mxu0 0
  %446 = vmatmul.mubr.bf16.gmra.mrb[0].mxu0 %v238
  %v447 = vpop.f32.mrb[0].mxu0
  %v448 = vadd.f32 0.0, %v447
  %v449 = vpop.f32.mrb[0].mxu0
  %v450 = vpop.f32.mrb[0].mxu0
  %v451 = vadd.f32 0.0, %v450
  %v452 = vpop.f32.mrb[0].mxu0
  %453 = vmatprep.mubr.bf16.mxu0 0
  %454 = vmatmul.mubr.bf16.gmra.mrb[0].mxu0 %v239
  %v455 = vpop.f32.mrb[0].mxu0
  %v456 = vadd.f32 0.0, %v455
  %v457 = vpop.f32.mrb[0].mxu0
  %v458 = vpop.f32.mrb[0].mxu0
  %v459 = vadd.f32 0.0, %v458
  %v460 = vpop.f32.mrb[0].mxu0
  %461 = vmatprep.mubr.bf16.mxu0 0
  %462 = vmatmul.mubr.bf16.gmra.mrb[0].mxu0 %v240
  %v463 = vpop.f32.mrb[0].mxu0
  %v464 = vadd.f32 0.0, %v463
  %v465 = vpop.f32.mrb[0].mxu0
  %v466 = vpop.f32.mrb[0].mxu0
  %v467 = vadd.f32 0.0, %v466
  %v468 = vpop.f32.mrb[0].mxu0
  %469 = vmatprep.mubr.bf16.mxu0 0
  %470 = vmatmul.mubr.bf16.gmra.mrb[0].mxu0 %v241
  %v471 = vpop.f32.mrb[0].mxu0
  %v472 = vadd.f32 0.0, %v471
  %v473 = vpop.f32.mrb[0].mxu0
  %v474 = vpop.f32.mrb[0].mxu0
  %v475 = vadd.f32 0.0, %v474
  %v476 = vpop.f32.mrb[0].mxu0
  %477 = vmatprep.mubr.bf16.mxu0 0
  %478 = vmatmul.mubr.bf16.gmra.mrb[0].mxu0 %v242
  %v479 = vpop.f32.mrb[0].mxu0
  %v480 = vadd.f32 0.0, %v479
  %v481 = vpop.f32.mrb[0].mxu0
  %v482 = vpop.f32.mrb[0].mxu0
  %v483 = vadd.f32 0.0, %v482
  %v484 = vpop.f32.mrb[0].mxu0
  %485 = vmatprep.mubr.bf16.mxu0 0
  %486 = vmatmul.mubr.bf16.gmra.mrb[0].mxu0 %v243
  %v487 = vpop.f32.mrb[0].mxu0
  %v488 = vadd.f32 0.0, %v487
  %v489 = vpop.f32.mrb[0].mxu0
  %v490 = vpop.f32.mrb[0].mxu0
  %v491 = vadd.f32 0.0, %v490
  %v492 = vpop.f32.mrb[0].mxu0
  %493 = vmatprep.mubr.bf16.mxu0 0
  %494 = vmatmul.mubr.bf16.gmra.mrb[0].mxu0 %v244
  %v495 = vpop.f32.mrb[0].mxu0
  %v496 = vadd.f32 0.0, %v495
  %v497 = vpop.f32.mrb[0].mxu0
  %v498 = vpop.f32.mrb[0].mxu0
  %v499 = vadd.f32 0.0, %v498
  %v500 = vpop.f32.mrb[0].mxu0
  %501 = vmatprep.mubr.bf16.mxu0 0
  %502 = vmatmul.mubr.bf16.gmra.mrb[0].mxu0 %v245
  %v503 = vpop.f32.mrb[0].mxu0
  %v504 = vadd.f32 0.0, %v503
  %v505 = vpop.f32.mrb[0].mxu0
  %v506 = vpop.f32.mrb[0].mxu0
  %v507 = vadd.f32 0.0, %v506
  %v508 = vpop.f32.mrb[0].mxu0
  %509 = vmatprep.mubr.bf16.mxu0 0
  %510 = vmatmul.mubr.bf16.gmra.mrb[0].mxu0 %v246
  %v511 = vpop.f32.mrb[0].mxu0
  %v512 = vadd.f32 0.0, %v511
  %v513 = vpop.f32.mrb[0].mxu0
  %v514 = vpop.f32.mrb[0].mxu0
  %v515 = vadd.f32 0.0, %v514
  %v516 = vpop.f32.mrb[0].mxu0
  %517 = vmatprep.mubr.bf16.mxu0 0
  %518 = vmatmul.mubr.bf16.gmra.mrb[0].mxu0 %v247
  %v519 = vpop.f32.mrb[0].mxu0
  %v520 = vadd.f32 0.0, %v519
  %v521 = vpop.f32.mrb[0].mxu0
  %v522 = vpop.f32.mrb[0].mxu0
  %v523 = vadd.f32 0.0, %v522
  %v524 = vpop.f32.mrb[0].mxu0
  %525 = vmatprep.mubr.bf16.mxu0 0
  %526 = vmatmul.mubr.bf16.gmra.mrb[0].mxu0 %v248
  %v527 = vpop.f32.mrb[0].mxu0
  %v528 = vadd.f32 0.0, %v527
  %v529 = vpop.f32.mrb[0].mxu0
  %v530 = vpop.f32.mrb[0].mxu0
  %v531 = vadd.f32 0.0, %v530
  %v532 = vpop.f32.mrb[0].mxu0
  %533 = vmatprep.mubr.bf16.mxu0 0
  %534 = vmatmul.mubr.bf16.gmra.mrb[0].mxu0 %v249
  %v535 = vpop.f32.mrb[0].mxu0
  %v536 = vadd.f32 0.0, %v535
  %v537 = vpop.f32.mrb[0].mxu0
  %v538 = vpop.f32.mrb[0].mxu0
  %v539 = vadd.f32 0.0, %v538
  %v540 = vpop.f32.mrb[0].mxu0
  %541 = vmatprep.mubr.bf16.mxu0 0
  %542 = vmatmul.mubr.bf16.gmra.mrb[0].mxu0 %v250
  %v543 = vpop.f32.mrb[0].mxu0
  %v544 = vadd.f32 0.0, %v543
  %v545 = vpop.f32.mrb[0].mxu0
  %v546 = vpop.f32.mrb[0].mxu0
  %v547 = vadd.f32 0.0, %v546
  %v548 = vpop.f32.mrb[0].mxu0
  %549 = vmatprep.mubr.bf16.mxu0 0
  %550 = vmatmul.mubr.bf16.gmra.mrb[0].mxu0 %v251
  %v551 = vpop.f32.mrb[0].mxu0
  %v552 = vadd.f32 0.0, %v551
  %v553 = vpop.f32.mrb[0].mxu0
  %v554 = vpop.f32.mrb[0].mxu0
  %v555 = vadd.f32 0.0, %v554
  %v556 = vpop.f32.mrb[0].mxu0
  %557 = vmatprep.mubr.bf16.mxu0 0
  %558 = vmatmul.mubr.bf16.gmra.mrb[0].mxu0 %v252
  %v559 = vpop.f32.mrb[0].mxu0
  %v560 = vadd.f32 0.0, %v559
  %v561 = vpop.f32.mrb[0].mxu0
  %v562 = vpop.f32.mrb[0].mxu0
  %v563 = vadd.f32 0.0, %v562
  %v564 = vpop.f32.mrb[0].mxu0
  %565 = vmatprep.mubr.bf16.mxu0 0
  %566 = vmatmul.mubr.bf16.gmra.mrb[0].mxu0 %v253
  %v567 = vpop.f32.mrb[0].mxu0
  %v568 = vadd.f32 0.0, %v567
  %v569 = vpop.f32.mrb[0].mxu0
  %v570 = vpop.f32.mrb[0].mxu0
  %v571 = vadd.f32 0.0, %v570
  %v572 = vpop.f32.mrb[0].mxu0
  %573 = vmatprep.mubr.bf16.mxu0 0
  %574 = vmatmul.mubr.bf16.gmra.mrb[0].mxu0 %v254
  %v575 = vpop.f32.mrb[0].mxu0
  %v576 = vadd.f32 0.0, %v575
  %v577 = vpop.f32.mrb[0].mxu0
  %v578 = vpop.f32.mrb[0].mxu0
  %v579 = vadd.f32 0.0, %v578
  %v580 = vpop.f32.mrb[0].mxu0
  %581 = vmatprep.mubr.bf16.mxu0 0
  %582 = vmatmul.mubr.bf16.gmra.mrb[0].mxu0 %v255
  %v583 = vpop.f32.mrb[0].mxu0
  %v584 = vadd.f32 0.0, %v583
  %v585 = vpop.f32.mrb[0].mxu0
  %v586 = vpop.f32.mrb[0].mxu0
  %v587 = vadd.f32 0.0, %v586
  %v588 = vpop.f32.mrb[0].mxu0
  %589 = vmatprep.mubr.bf16.mxu0 0
  %590 = vmatmul.mubr.bf16.gmra.mrb[0].mxu0 %v256
  %v591 = vpop.f32.mrb[0].mxu0
  %v592 = vadd.f32 0.0, %v591
  %v593 = vpop.f32.mrb[0].mxu0
  %v594 = vpop.f32.mrb[0].mxu0
  %v595 = vadd.f32 0.0, %v594
  %v596 = vpop.f32.mrb[0].mxu0
  %597 = vmatprep.mubr.bf16.mxu0 0
  %598 = vmatmul.mubr.bf16.gmra.mrb[0].mxu0 %v257
  %v599 = vpop.f32.mrb[0].mxu0
  %v600 = vadd.f32 0.0, %v599
  %v601 = vpop.f32.mrb[0].mxu0
  %v602 = vpop.f32.mrb[0].mxu0
  %v603 = vadd.f32 0.0, %v602
  %v604 = vpop.f32.mrb[0].mxu0
  %605 = vmatprep.mubr.bf16.mxu0 0
  %606 = vmatmul.mubr.bf16.gmra.mrb[0].mxu0 %v258
  %v607 = vpop.f32.mrb[0].mxu0
  %v608 = vadd.f32 0.0, %v607
  %v609 = vpop.f32.mrb[0].mxu0
  %v610 = vpop.f32.mrb[0].mxu0
  %v611 = vadd.f32 0.0, %v610
  %v612 = vpop.f32.mrb[0].mxu0
  %613 = vmatprep.mubr.bf16.mxu0 0
  %614 = vmatmul.mubr.bf16.gmra.mrb[0].mxu0 %v259
  %v615 = vpop.f32.mrb[0].mxu0
  %v616 = vadd.f32 0.0, %v615
  %v617 = vpop.f32.mrb[0].mxu0
  %v618 = vpop.f32.mrb[0].mxu0
  %v619 = vadd.f32 0.0, %v618
  %v620 = vpop.f32.mrb[0].mxu0
  %621 = vmatprep.mubr.bf16.mxu0 0
  %622 = vmatmul.mubr.bf16.gmra.mrb[0].mxu0 %v260
  %v623 = vpop.f32.mrb[0].mxu0
  %v624 = vadd.f32 0.0, %v623
  %v625 = vpop.f32.mrb[0].mxu0
  %v626 = vpop.f32.mrb[0].mxu0
  %v627 = vadd.f32 0.0, %v626
  %v628 = vpop.f32.mrb[0].mxu0
  %629 = vdwg.mxu0
  %630 = vst [vmem:[%s2] sm:$0xff] %v376
  %631 = vst [vmem:[%s2 + $0x8] sm:$0xff] %v379
  %632 = vst [vmem:[%s2 + $0x10] sm:$0xff] %v384
  %633 = vst [vmem:[%s2 + $0x18] sm:$0xff] %v387
  %634 = vst [vmem:[%s2 + $0x20] sm:$0xff] %v392
  %635 = vst [vmem:[%s2 + $0x28] sm:$0xff] %v395
  %636 = vst [vmem:[%s2 + $0x30] sm:$0xff] %v400
  %637 = vst [vmem:[%s2 + $0x38] sm:$0xff] %v403
  %638 = vst [vmem:[%s2 + $0x40] sm:$0xff] %v408
  %639 = vst [vmem:[%s2 + $0x48] sm:$0xff] %v411
  %640 = vst [vmem:[%s2 + $0x50] sm:$0xff] %v416
  %641 = vst [vmem:[%s2 + $0x58] sm:$0xff] %v419
  %642 = vst [vmem:[%s2 + $0x60] sm:$0xff] %v424
  %643 = vst [vmem:[%s2 + $0x68] sm:$0xff] %v427
  %644 = vst [vmem:[%s2 + $0x70] sm:$0xff] %v432
  %645 = vst [vmem:[%s2 + $0x78] sm:$0xff] %v435
  %646 = vst [vmem:[%s2 + $0x80] sm:$0xff] %v440
  %647 = vst [vmem:[%s2 + $0x88] sm:$0xff] %v443
  %648 = vst [vmem:[%s2 + $0x90] sm:$0xff] %v448
  %649 = vst [vmem:[%s2 + $0x98] sm:$0xff] %v451
  %650 = vst [vmem:[%s2 + $0xa0] sm:$0xff] %v456
  %651 = vst [vmem:[%s2 + $0xa8] sm:$0xff] %v459
  %652 = vst [vmem:[%s2 + $0xb0] sm:$0xff] %v464
  %653 = vst [vmem:[%s2 + $0xb8] sm:$0xff] %v467
  %654 = vst [vmem:[%s2 + $0xc0] sm:$0xff] %v472
  %655 = vst [vmem:[%s2 + $0xc8] sm:$0xff] %v475
  %656 = vst [vmem:[%s2 + $0xd0] sm:$0xff] %v480
  %657 = vst [vmem:[%s2 + $0xd8] sm:$0xff] %v483
  %658 = vst [vmem:[%s2 + $0xe0] sm:$0xff] %v488
  %659 = vst [vmem:[%s2 + $0xe8] sm:$0xff] %v491
  %660 = vst [vmem:[%s2 + $0xf0] sm:$0xff] %v496
  %661 = vst [vmem:[%s2 + $0xf8] sm:$0xff] %v499
  %662 = vst [vmem:[%s2 + $0x100] sm:$0xff] %v504
  %663 = vst [vmem:[%s2 + $0x108] sm:$0xff] %v507
  %664 = vst [vmem:[%s2 + $0x110] sm:$0xff] %v512
  %665 = vst [vmem:[%s2 + $0x118] sm:$0xff] %v515
  %666 = vst [vmem:[%s2 + $0x120] sm:$0xff] %v520
  %667 = vst [vmem:[%s2 + $0x128] sm:$0xff] %v523
  %668 = vst [vmem:[%s2 + $0x130] sm:$0xff] %v528
  %669 = vst [vmem:[%s2 + $0x138] sm:$0xff] %v531
  %670 = vst [vmem:[%s2 + $0x140] sm:$0xff] %v536
  %671 = vst [vmem:[%s2 + $0x148] sm:$0xff] %v539
  %672 = vst [vmem:[%s2 + $0x150] sm:$0xff] %v544
  %673 = vst [vmem:[%s2 + $0x158] sm:$0xff] %v547
  %674 = vst [vmem:[%s2 + $0x160] sm:$0xff] %v552
  %675 = vst [vmem:[%s2 + $0x168] sm:$0xff] %v555
  %676 = vst [vmem:[%s2 + $0x170] sm:$0xff] %v560
  %677 = vst [vmem:[%s2 + $0x178] sm:$0xff] %v563
  %678 = vst [vmem:[%s2 + $0x180] sm:$0xff] %v568
  %679 = vst [vmem:[%s2 + $0x188] sm:$0xff] %v571
  %680 = vst [vmem:[%s2 + $0x190] sm:$0xff] %v576
  %681 = vst [vmem:[%s2 + $0x198] sm:$0xff] %v579
  %682 = vst [vmem:[%s2 + $0x1a0] sm:$0xff] %v584
  %683 = vst [vmem:[%s2 + $0x1a8] sm:$0xff] %v587
  %684 = vst [vmem:[%s2 + $0x1b0] sm:$0xff] %v592
  %685 = vst [vmem:[%s2 + $0x1b8] sm:$0xff] %v595
  %686 = vst [vmem:[%s2 + $0x1c0] sm:$0xff] %v600
  %687 = vst [vmem:[%s2 + $0x1c8] sm:$0xff] %v603
  %688 = vst [vmem:[%s2 + $0x1d0] sm:$0xff] %v608
  %689 = vst [vmem:[%s2 + $0x1d8] sm:$0xff] %v611
  %690 = vst [vmem:[%s2 + $0x1e0] sm:$0xff] %v616
  %691 = vst [vmem:[%s2 + $0x1e8] sm:$0xff] %v619
  %692 = vst [vmem:[%s2 + $0x1f0] sm:$0xff] %v624
  %693 = vst [vmem:[%s2 + $0x1f8] sm:$0xff] %v627
  %v694 = vld [vmem:[%s3] sm:$0x1]
  %v695 = vadd.f32 %v376, %v379
  %v696 = vadd.f32 %v695, %v384
  %v697 = vadd.f32 %v696, %v387
  %v698 = vadd.f32 %v697, %v392
  %v699 = vadd.f32 %v698, %v395
  %v700 = vadd.f32 %v699, %v400
  %v701 = vadd.f32 %v700, %v403
  %v702 = vadd.f32 %v701, %v408
  %v703 = vadd.f32 %v702, %v411
  %v704 = vadd.f32 %v703, %v416
  %v705 = vadd.f32 %v704, %v419
  %v706 = vadd.f32 %v705, %v424
  %v707 = vadd.f32 %v706, %v427
  %v708 = vadd.f32 %v707, %v432
  %v709 = vadd.f32 %v708, %v435
  %v710 = vadd.f32 %v709, %v440
  %v711 = vadd.f32 %v710, %v443
  %v712 = vadd.f32 %v711, %v448
  %v713 = vadd.f32 %v712, %v451
  %v714 = vadd.f32 %v713, %v456
  %v715 = vadd.f32 %v714, %v459
  %v716 = vadd.f32 %v715, %v464
  %v717 = vadd.f32 %v716, %v467
  %v718 = vadd.f32 %v717, %v472
  %v719 = vadd.f32 %v718, %v475
  %v720 = vadd.f32 %v719, %v480
  %v721 = vadd.f32 %v720, %v483
  %v722 = vadd.f32 %v721, %v488
  %v723 = vadd.f32 %v722, %v491
  %v724 = vadd.f32 %v723, %v496
  %v725 = vadd.f32 %v724, %v499
  %v726 = vadd.f32 %v725, %v504
  %v727 = vadd.f32 %v726, %v507
  %v728 = vadd.f32 %v727, %v512
  %v729 = vadd.f32 %v728, %v515
  %v730 = vadd.f32 %v729, %v520
  %v731 = vadd.f32 %v730, %v523
  %v732 = vadd.f32 %v731, %v528
  %v733 = vadd.f32 %v732, %v531
  %v734 = vadd.f32 %v733, %v536
  %v735 = vadd.f32 %v734, %v539
  %v736 = vadd.f32 %v735, %v544
  %v737 = vadd.f32 %v736, %v547
  %v738 = vadd.f32 %v737, %v552
  %v739 = vadd.f32 %v738, %v555
  %v740 = vadd.f32 %v739, %v560
  %v741 = vadd.f32 %v740, %v563
  %v742 = vadd.f32 %v741, %v568
  %v743 = vadd.f32 %v742, %v571
  %v744 = vadd.f32 %v743, %v576
  %v745 = vadd.f32 %v744, %v579
  %v746 = vadd.f32 %v745, %v584
  %v747 = vadd.f32 %v746, %v587
  %v748 = vadd.f32 %v747, %v592
  %v749 = vadd.f32 %v748, %v595
  %v750 = vadd.f32 %v749, %v600
  %v751 = vadd.f32 %v750, %v603
  %v752 = vadd.f32 %v751, %v608
  %v753 = vadd.f32 %v752, %v611
  %v754 = vadd.f32 %v753, %v616
  %v755 = vadd.f32 %v754, %v619
  %v756 = vadd.f32 %v755, %v624
  %v757 = vadd.f32 %v756, %v627
  %v758 = vrot.slane %v757, 4
  %v759 = vadd.f32 %v757, %v758
  %v760 = vrot.slane %v759, 2
  %v761 = vadd.f32 %v759, %v760
  %v762 = vrot.slane %v761, 1
  %v763 = vadd.f32 %v761, %v762
  %v764 = vadd.f32 %v694, %v763
  %765 = vst [vmem:[%s3] sm:$0x1] %v764
  %v766 = vld [vmem:[%s4] sm:$0x1]
  %v767 = vmul.f32 %v376, %v376
  %v768 = vmul.f32 %v379, %v379
  %v769 = vmul.f32 %v384, %v384
  %v770 = vmul.f32 %v387, %v387
  %v771 = vmul.f32 %v392, %v392
  %v772 = vmul.f32 %v395, %v395
  %v773 = vmul.f32 %v400, %v400
  %v774 = vmul.f32 %v403, %v403
  %v775 = vmul.f32 %v408, %v408
  %v776 = vmul.f32 %v411, %v411
  %v777 = vmul.f32 %v416, %v416
  %v778 = vmul.f32 %v419, %v419
  %v779 = vmul.f32 %v424, %v424
  %v780 = vmul.f32 %v427, %v427
  %v781 = vmul.f32 %v432, %v432
  %v782 = vmul.f32 %v435, %v435
  %v783 = vmul.f32 %v440, %v440
  %v784 = vmul.f32 %v443, %v443
  %v785 = vmul.f32 %v448, %v448
  %v786 = vmul.f32 %v451, %v451
  %v787 = vmul.f32 %v456, %v456
  %v788 = vmul.f32 %v459, %v459
  %v789 = vmul.f32 %v464, %v464
  %v790 = vmul.f32 %v467, %v467
  %v791 = vmul.f32 %v472, %v472
  %v792 = vmul.f32 %v475, %v475
  %v793 = vmul.f32 %v480, %v480
  %v794 = vmul.f32 %v483, %v483
  %v795 = vmul.f32 %v488, %v488
  %v796 = vmul.f32 %v491, %v491
  %v797 = vmul.f32 %v496, %v496
  %v798 = vmul.f32 %v499, %v499
  %v799 = vmul.f32 %v504, %v504
  %v800 = vmul.f32 %v507, %v507
  %v801 = vmul.f32 %v512, %v512
  %v802 = vmul.f32 %v515, %v515
  %v803 = vmul.f32 %v520, %v520
  %v804 = vmul.f32 %v523, %v523
  %v805 = vmul.f32 %v528, %v528
  %v806 = vmul.f32 %v531, %v531
  %v807 = vmul.f32 %v536, %v536
  %v808 = vmul.f32 %v539, %v539
  %v809 = vmul.f32 %v544, %v544
  %v810 = vmul.f32 %v547, %v547
  %v811 = vmul.f32 %v552, %v552
  %v812 = vmul.f32 %v555, %v555
  %v813 = vmul.f32 %v560, %v560
  %v814 = vmul.f32 %v563, %v563
  %v815 = vmul.f32 %v568, %v568
  %v816 = vmul.f32 %v571, %v571
  %v817 = vmul.f32 %v576, %v576
  %v818 = vmul.f32 %v579, %v579
  %v819 = vmul.f32 %v584, %v584
  %v820 = vmul.f32 %v587, %v587
  %v821 = vmul.f32 %v592, %v592
  %v822 = vmul.f32 %v595, %v595
  %v823 = vmul.f32 %v600, %v600
  %v824 = vmul.f32 %v603, %v603
  %v825 = vmul.f32 %v608, %v608
  %v826 = vmul.f32 %v611, %v611
  %v827 = vmul.f32 %v616, %v616
  %v828 = vmul.f32 %v619, %v619
  %v829 = vmul.f32 %v624, %v624
  %v830 = vmul.f32 %v627, %v627
  %v831 = vadd.f32 %v767, %v768
  %v832 = vadd.f32 %v831, %v769
  %v833 = vadd.f32 %v832, %v770
  %v834 = vadd.f32 %v833, %v771
  %v835 = vadd.f32 %v834, %v772
  %v836 = vadd.f32 %v835, %v773
  %v837 = vadd.f32 %v836, %v774
  %v838 = vadd.f32 %v837, %v775
  %v839 = vadd.f32 %v838, %v776
  %v840 = vadd.f32 %v839, %v777
  %v841 = vadd.f32 %v840, %v778
  %v842 = vadd.f32 %v841, %v779
  %v843 = vadd.f32 %v842, %v780
  %v844 = vadd.f32 %v843, %v781
  %v845 = vadd.f32 %v844, %v782
  %v846 = vadd.f32 %v845, %v783
  %v847 = vadd.f32 %v846, %v784
  %v848 = vadd.f32 %v847, %v785
  %v849 = vadd.f32 %v848, %v786
  %v850 = vadd.f32 %v849, %v787
  %v851 = vadd.f32 %v850, %v788
  %v852 = vadd.f32 %v851, %v789
  %v853 = vadd.f32 %v852, %v790
  %v854 = vadd.f32 %v853, %v791
  %v855 = vadd.f32 %v854, %v792
  %v856 = vadd.f32 %v855, %v793
  %v857 = vadd.f32 %v856, %v794
  %v858 = vadd.f32 %v857, %v795
  %v859 = vadd.f32 %v858, %v796
  %v860 = vadd.f32 %v859, %v797
  %v861 = vadd.f32 %v860, %v798
  %v862 = vadd.f32 %v861, %v799
  %v863 = vadd.f32 %v862, %v800
  %v864 = vadd.f32 %v863, %v801
  %v865 = vadd.f32 %v864, %v802
  %v866 = vadd.f32 %v865, %v803
  %v867 = vadd.f32 %v866, %v804
  %v868 = vadd.f32 %v867, %v805
  %v869 = vadd.f32 %v868, %v806
  %v870 = vadd.f32 %v869, %v807
  %v871 = vadd.f32 %v870, %v808
  %v872 = vadd.f32 %v871, %v809
  %v873 = vadd.f32 %v872, %v810
  %v874 = vadd.f32 %v873, %v811
  %v875 = vadd.f32 %v874, %v812
  %v876 = vadd.f32 %v875, %v813
  %v877 = vadd.f32 %v876, %v814
  %v878 = vadd.f32 %v877, %v815
  %v879 = vadd.f32 %v878, %v816
  %v880 = vadd.f32 %v879, %v817
  %v881 = vadd.f32 %v880, %v818
  %v882 = vadd.f32 %v881, %v819
  %v883 = vadd.f32 %v882, %v820
  %v884 = vadd.f32 %v883, %v821
  %v885 = vadd.f32 %v884, %v822
  %v886 = vadd.f32 %v885, %v823
  %v887 = vadd.f32 %v886, %v824
  %v888 = vadd.f32 %v887, %v825
  %v889 = vadd.f32 %v888, %v826
  %v890 = vadd.f32 %v889, %v827
  %v891 = vadd.f32 %v890, %v828
  %v892 = vadd.f32 %v891, %v829
  %v893 = vadd.f32 %v892, %v830
  %v894 = vrot.slane %v893, 4
  %v895 = vadd.f32 %v893, %v894
  %v896 = vrot.slane %v895, 2
  %v897 = vadd.f32 %v895, %v896
  %v898 = vrot.slane %v897, 1
  %v899 = vadd.f32 %v897, %v898
  %v900 = vadd.f32 %v766, %v899
  %901 = vst [vmem:[%s4] sm:$0x1] %v900
  // Predicated region
  $region14: #{bottleneck_forward.7} parent=0 // pred_check
    _
  $region15: #{bottleneck_forward.7} parent=0 // pred_check_branch
    %903 = sbr.rel (0) target = $region17
  $region16: #{bottleneck_forward.7} parent=0 // pred_region
    _
  $region17: #{bottleneck_forward.7} parent=0 // pred_fallthru
    _
  // Predicated region
  $region18: #{bottleneck_forward.7} parent=0 // pred_check
    _
  $region19: #{bottleneck_forward.7} parent=0 // pred_check_branch
    %905 = sbr.rel (0) target = $region21
  $region20: #{bottleneck_forward.7} parent=0 // pred_region
    _
  $region21: #{bottleneck_forward.7} parent=0 // pred_fallthru
    _
  // Predicated region
  $region22: #{bottleneck_forward.7} parent=0 // pred_check
    _
  $region23: #{bottleneck_forward.7} parent=0 // pred_check_branch
    %907 = sbr.rel (0) target = $region25
  $region24: #{bottleneck_forward.7} parent=0 // pred_region
    _
  $region25: #{bottleneck_forward.7} parent=0 // pred_fallthru
    _
  // Predicated region
  $region26: #{bottleneck_forward.7} parent=0 // pred_check
    _
  $region27: #{bottleneck_forward.7} parent=0 // pred_check_branch
    %909 = sbr.rel (0) target = $region29
  $region28: #{bottleneck_forward.7} parent=0 // pred_region
    _
  $region29: #{bottleneck_forward.7} parent=0 // pred_fallthru
    _
  // Predicated region
  $region30: #{bottleneck_forward.7} parent=0 // pred_check
    _
  $region31: #{bottleneck_forward.7} parent=0 // pred_check_branch
    %911 = sbr.rel (0) target = $region33
  $region32: #{bottleneck_forward.7} parent=0 // pred_region
    _
  $region33: #{bottleneck_forward.7} parent=0 // pred_fallthru
    _
  // Predicated region
  $region34: #{bottleneck_forward.7} parent=0 // pred_check
    _
  $region35: #{bottleneck_forward.7} parent=0 // pred_check_branch
    %913 = sbr.rel (0) target = $region37
  $region36: #{bottleneck_forward.7} parent=0 // pred_region
    _
  $region37: #{bottleneck_forward.7} parent=0 // pred_fallthru
    _

// kernel: bottleneck_forward.13
$region0: #{bottleneck_forward.13}
  #allocation0 [shape = 'u32[]', space=smem, size = 0x4, offset = 0x4, fixed_abs, tag = 'smem constant byte address 0x4 - core index']
  #allocation1 [shape = 'u32[144,128]{1,0:T(1,128)}', space=vmem, size = 0x12000, scoped, tag = 'internal scratch']
  %s0 = inlined_call_operand.vmem [shape: f32[512,128], index: 0, kind: input, shape index: {}]
  %s1 = inlined_call_operand.vmem [shape: f32[1,128], index: 1, kind: input, shape index: {}]
  %s2 = inlined_call_operand.vmem [shape: f32[1,128], index: 2, kind: input, shape index: {}]
  %s3 = inlined_call_operand.vmem [shape: f32[1,128], index: 3, kind: input, shape index: {}]
  %s4 = inlined_call_operand.vmem [shape: f32[1,128], index: 4, kind: input, shape index: {}]
  %s5 = inlined_call_operand.vmem [shape: f32[512,128], index: 5, kind: input, shape index: {}]
  %s6 = inlined_call_operand.vmem [shape: f32[1,128], index: 6, kind: input, shape index: {}]
  %s7 = inlined_call_operand.vmem [shape: f32[1,128], index: 7, kind: input, shape index: {}]
  %s8 = inlined_call_operand.vmem [shape: f32[1,128], index: 8, kind: input, shape index: {}]
  %s9 = inlined_call_operand.vmem [shape: f32[1,128], index: 9, kind: input, shape index: {}]
  %s10 = inlined_call_operand.vmem [shape: f32[512,128], index: 10, kind: output, shape index: {}]
  %s11 = sld [smem:[#allocation0]]
  $region50: #{bottleneck_forward.13} parent=0
    _
  %s13 = ssub.s32 1, %s11
  %s14 = scalar_select 0, %s13, %s11
  // Predicated region
  $region2: #{bottleneck_forward.13} parent=0 // pred_check
    _
  $region3: #{bottleneck_forward.13} parent=0 // pred_check_branch
    %16 = sbr.rel (0) target = $region5
  $region4: #{bottleneck_forward.13} parent=0 // pred_region
    _
  $region5: #{bottleneck_forward.13} parent=0 // pred_fallthru
    _
  // Predicated region
  $region6: #{bottleneck_forward.13} parent=0 // pred_check
    _
  $region7: #{bottleneck_forward.13} parent=0 // pred_check_branch
    %18 = sbr.rel (0) target = $region9
  $region8: #{bottleneck_forward.13} parent=0 // pred_region
    _
  $region9: #{bottleneck_forward.13} parent=0 // pred_fallthru
    _
  // Predicated region
  $region10: #{bottleneck_forward.13} parent=0 // pred_check
    _
  $region11: #{bottleneck_forward.13} parent=0 // pred_check_branch
    %20 = sbr.rel (0) target = $region13
  $region12: #{bottleneck_forward.13} parent=0 // pred_region
    _
  $region13: #{bottleneck_forward.13} parent=0 // pred_fallthru
    _
  // Predicated region
  $region14: #{bottleneck_forward.13} parent=0 // pred_check
    _
  $region15: #{bottleneck_forward.13} parent=0 // pred_check_branch
    %22 = sbr.rel (0) target = $region17
  $region16: #{bottleneck_forward.13} parent=0 // pred_region
    _
  $region17: #{bottleneck_forward.13} parent=0 // pred_fallthru
    _
  // Predicated region
  $region18: #{bottleneck_forward.13} parent=0 // pred_check
    _
  $region19: #{bottleneck_forward.13} parent=0 // pred_check_branch
    %24 = sbr.rel (0) target = $region21
  $region20: #{bottleneck_forward.13} parent=0 // pred_region
    _
  $region21: #{bottleneck_forward.13} parent=0 // pred_fallthru
    _
  // Predicated region
  $region22: #{bottleneck_forward.13} parent=0 // pred_check
    _
  $region23: #{bottleneck_forward.13} parent=0 // pred_check_branch
    %26 = sbr.rel (0) target = $region25
  $region24: #{bottleneck_forward.13} parent=0 // pred_region
    _
  $region25: #{bottleneck_forward.13} parent=0 // pred_fallthru
    _
  // Predicated region
  $region26: #{bottleneck_forward.13} parent=0 // pred_check
    _
  $region27: #{bottleneck_forward.13} parent=0 // pred_check_branch
    %28 = sbr.rel (0) target = $region29
  $region28: #{bottleneck_forward.13} parent=0 // pred_region
    _
  $region29: #{bottleneck_forward.13} parent=0 // pred_fallthru
    _
  // Predicated region
  $region30: #{bottleneck_forward.13} parent=0 // pred_check
    _
  $region31: #{bottleneck_forward.13} parent=0 // pred_check_branch
    %30 = sbr.rel (0) target = $region33
  $region32: #{bottleneck_forward.13} parent=0 // pred_region
    _
  $region33: #{bottleneck_forward.13} parent=0 // pred_fallthru
    _
  // Predicated region
  $region34: #{bottleneck_forward.13} parent=0 // pred_check
    _
  $region35: #{bottleneck_forward.13} parent=0 // pred_check_branch
    %32 = sbr.rel (0) target = $region37
  $region36: #{bottleneck_forward.13} parent=0 // pred_region
    _
  $region37: #{bottleneck_forward.13} parent=0 // pred_fallthru
    _
  // Predicated region
  $region38: #{bottleneck_forward.13} parent=0 // pred_check
    _
  $region39: #{bottleneck_forward.13} parent=0 // pred_check_branch
    %34 = sbr.rel (0) target = $region41
  $region40: #{bottleneck_forward.13} parent=0 // pred_region
    _
  $region41: #{bottleneck_forward.13} parent=0 // pred_fallthru
    _
  %v35 = vld [vmem:[%s0] sm:$0xff]
  %v36 = vld [vmem:[%s0 + $0x8] sm:$0xff]
  %v37 = vld [vmem:[%s0 + $0x10] sm:$0xff]
  %v38 = vld [vmem:[%s0 + $0x18] sm:$0xff]
  %v39 = vld [vmem:[%s0 + $0x20] sm:$0xff]
  %v40 = vld [vmem:[%s0 + $0x28] sm:$0xff]
  %v41 = vld [vmem:[%s0 + $0x30] sm:$0xff]
  %v42 = vld [vmem:[%s0 + $0x38] sm:$0xff]
  %v43 = vld [vmem:[%s0 + $0x40] sm:$0xff]
  %v44 = vld [vmem:[%s0 + $0x48] sm:$0xff]
  %v45 = vld [vmem:[%s0 + $0x50] sm:$0xff]
  %v46 = vld [vmem:[%s0 + $0x58] sm:$0xff]
  %v47 = vld [vmem:[%s0 + $0x60] sm:$0xff]
  %v48 = vld [vmem:[%s0 + $0x68] sm:$0xff]
  %v49 = vld [vmem:[%s0 + $0x70] sm:$0xff]
  %v50 = vld [vmem:[%s0 + $0x78] sm:$0xff]
  %v51 = vld [vmem:[%s0 + $0x80] sm:$0xff]
  %v52 = vld [vmem:[%s0 + $0x88] sm:$0xff]
  %v53 = vld [vmem:[%s0 + $0x90] sm:$0xff]
  %v54 = vld [vmem:[%s0 + $0x98] sm:$0xff]
  %v55 = vld [vmem:[%s0 + $0xa0] sm:$0xff]
  %v56 = vld [vmem:[%s0 + $0xa8] sm:$0xff]
  %v57 = vld [vmem:[%s0 + $0xb0] sm:$0xff]
  %v58 = vld [vmem:[%s0 + $0xb8] sm:$0xff]
  %v59 = vld [vmem:[%s0 + $0xc0] sm:$0xff]
  %v60 = vld [vmem:[%s0 + $0xc8] sm:$0xff]
  %v61 = vld [vmem:[%s0 + $0xd0] sm:$0xff]
  %v62 = vld [vmem:[%s0 + $0xd8] sm:$0xff]
  %v63 = vld [vmem:[%s0 + $0xe0] sm:$0xff]
  %v64 = vld [vmem:[%s0 + $0xe8] sm:$0xff]
  %v65 = vld [vmem:[%s0 + $0xf0] sm:$0xff]
  %v66 = vld [vmem:[%s0 + $0xf8] sm:$0xff]
  %v67 = vld [vmem:[%s0 + $0x100] sm:$0xff]
  %v68 = vld [vmem:[%s0 + $0x108] sm:$0xff]
  %v69 = vld [vmem:[%s0 + $0x110] sm:$0xff]
  %v70 = vld [vmem:[%s0 + $0x118] sm:$0xff]
  %v71 = vld [vmem:[%s0 + $0x120] sm:$0xff]
  %v72 = vld [vmem:[%s0 + $0x128] sm:$0xff]
  %v73 = vld [vmem:[%s0 + $0x130] sm:$0xff]
  %v74 = vld [vmem:[%s0 + $0x138] sm:$0xff]
  %v75 = vld [vmem:[%s0 + $0x140] sm:$0xff]
  %v76 = vld [vmem:[%s0 + $0x148] sm:$0xff]
  %v77 = vld [vmem:[%s0 + $0x150] sm:$0xff]
  %v78 = vld [vmem:[%s0 + $0x158] sm:$0xff]
  %v79 = vld [vmem:[%s0 + $0x160] sm:$0xff]
  %v80 = vld [vmem:[%s0 + $0x168] sm:$0xff]
  %v81 = vld [vmem:[%s0 + $0x170] sm:$0xff]
  %v82 = vld [vmem:[%s0 + $0x178] sm:$0xff]
  %v83 = vld [vmem:[%s0 + $0x180] sm:$0xff]
  %v84 = vld [vmem:[%s0 + $0x188] sm:$0xff]
  %v85 = vld [vmem:[%s0 + $0x190] sm:$0xff]
  %v86 = vld [vmem:[%s0 + $0x198] sm:$0xff]
  %v87 = vld [vmem:[%s0 + $0x1a0] sm:$0xff]
  %v88 = vld [vmem:[%s0 + $0x1a8] sm:$0xff]
  %v89 = vld [vmem:[%s0 + $0x1b0] sm:$0xff]
  %v90 = vld [vmem:[%s0 + $0x1b8] sm:$0xff]
  %v91 = vld [vmem:[%s0 + $0x1c0] sm:$0xff]
  %v92 = vld [vmem:[%s0 + $0x1c8] sm:$0xff]
  %v93 = vld [vmem:[%s0 + $0x1d0] sm:$0xff]
  %v94 = vld [vmem:[%s0 + $0x1d8] sm:$0xff]
  %v95 = vld [vmem:[%s0 + $0x1e0] sm:$0xff]
  %v96 = vld [vmem:[%s0 + $0x1e8] sm:$0xff]
  %v97 = vld [vmem:[%s0 + $0x1f0] sm:$0xff]
  %v98 = vld [vmem:[%s0 + $0x1f8] sm:$0xff]
  %v99 = vld [vmem:[%s1] sm:$0x1]
  %v100 = vld [vmem:[%s2] sm:$0x1]
  %v101 = vld [vmem:[%s3] sm:$0x1]
  %v102 = vld [vmem:[%s4] sm:$0x1]
  %v103 = vmul.f32 %v99, 0.001953125
  %v104 = vmul.f32 %v100, 0.001953125
  %v105 = vmul.f32 %v103, %v103
  %v106 = vsub.f32 %v104, %v105
  %v107 = vmax.f32 %v106, 0.0
  %v109 = vlaneseq
  %v110 = vshrl.u32 %v109, 7
  %v111 = vsub.s32 0, %v110
  %v112 = vrot.slane %v103, %v111
  %v114 = vsub.f32 %v35, %v112
  %v115 = vsub.f32 %v36, %v112
  %v116 = vsub.f32 %v37, %v112
  %v117 = vsub.f32 %v38, %v112
  %v118 = vsub.f32 %v39, %v112
  %v119 = vsub.f32 %v40, %v112
  %v120 = vsub.f32 %v41, %v112
  %v121 = vsub.f32 %v42, %v112
  %v122 = vsub.f32 %v43, %v112
  %v123 = vsub.f32 %v44, %v112
  %v124 = vsub.f32 %v45, %v112
  %v125 = vsub.f32 %v46, %v112
  %v126 = vsub.f32 %v47, %v112
  %v127 = vsub.f32 %v48, %v112
  %v128 = vsub.f32 %v49, %v112
  %v129 = vsub.f32 %v50, %v112
  %v130 = vsub.f32 %v51, %v112
  %v131 = vsub.f32 %v52, %v112
  %v132 = vsub.f32 %v53, %v112
  %v133 = vsub.f32 %v54, %v112
  %v134 = vsub.f32 %v55, %v112
  %v135 = vsub.f32 %v56, %v112
  %v136 = vsub.f32 %v57, %v112
  %v137 = vsub.f32 %v58, %v112
  %v138 = vsub.f32 %v59, %v112
  %v139 = vsub.f32 %v60, %v112
  %v140 = vsub.f32 %v61, %v112
  %v141 = vsub.f32 %v62, %v112
  %v142 = vsub.f32 %v63, %v112
  %v143 = vsub.f32 %v64, %v112
  %v144 = vsub.f32 %v65, %v112
  %v145 = vsub.f32 %v66, %v112
  %v146 = vsub.f32 %v67, %v112
  %v147 = vsub.f32 %v68, %v112
  %v148 = vsub.f32 %v69, %v112
  %v149 = vsub.f32 %v70, %v112
  %v150 = vsub.f32 %v71, %v112
  %v151 = vsub.f32 %v72, %v112
  %v152 = vsub.f32 %v73, %v112
  %v153 = vsub.f32 %v74, %v112
  %v154 = vsub.f32 %v75, %v112
  %v155 = vsub.f32 %v76, %v112
  %v156 = vsub.f32 %v77, %v112
  %v157 = vsub.f32 %v78, %v112
  %v158 = vsub.f32 %v79, %v112
  %v159 = vsub.f32 %v80, %v112
  %v160 = vsub.f32 %v81, %v112
  %v161 = vsub.f32 %v82, %v112
  %v162 = vsub.f32 %v83, %v112
  %v163 = vsub.f32 %v84, %v112
  %v164 = vsub.f32 %v85, %v112
  %v165 = vsub.f32 %v86, %v112
  %v166 = vsub.f32 %v87, %v112
  %v167 = vsub.f32 %v88, %v112
  %v168 = vsub.f32 %v89, %v112
  %v169 = vsub.f32 %v90, %v112
  %v170 = vsub.f32 %v91, %v112
  %v171 = vsub.f32 %v92, %v112
  %v172 = vsub.f32 %v93, %v112
  %v173 = vsub.f32 %v94, %v112
  %v174 = vsub.f32 %v95, %v112
  %v175 = vsub.f32 %v96, %v112
  %v176 = vsub.f32 %v97, %v112
  %v177 = vsub.f32 %v98, %v112
  %v178 = vadd.f32 %v107, 1e-05
  %v179 = vrsqrt.pop %v178
  %v180 = vmul.f32 %v179, %v101
  %v182 = vlaneseq
  %v183 = vshrl.u32 %v182, 7
  %v184 = vsub.s32 0, %v183
  %v185 = vrot.slane %v180, %v184
  %v187 = vmul.f32 %v114, %v185
  %v188 = vmul.f32 %v115, %v185
  %v189 = vmul.f32 %v116, %v185
  %v190 = vmul.f32 %v117, %v185
  %v191 = vmul.f32 %v118, %v185
  %v192 = vmul.f32 %v119, %v185
  %v193 = vmul.f32 %v120, %v185
  %v194 = vmul.f32 %v121, %v185
  %v195 = vmul.f32 %v122, %v185
  %v196 = vmul.f32 %v123, %v185
  %v197 = vmul.f32 %v124, %v185
  %v198 = vmul.f32 %v125, %v185
  %v199 = vmul.f32 %v126, %v185
  %v200 = vmul.f32 %v127, %v185
  %v201 = vmul.f32 %v128, %v185
  %v202 = vmul.f32 %v129, %v185
  %v203 = vmul.f32 %v130, %v185
  %v204 = vmul.f32 %v131, %v185
  %v205 = vmul.f32 %v132, %v185
  %v206 = vmul.f32 %v133, %v185
  %v207 = vmul.f32 %v134, %v185
  %v208 = vmul.f32 %v135, %v185
  %v209 = vmul.f32 %v136, %v185
  %v210 = vmul.f32 %v137, %v185
  %v211 = vmul.f32 %v138, %v185
  %v212 = vmul.f32 %v139, %v185
  %v213 = vmul.f32 %v140, %v185
  %v214 = vmul.f32 %v141, %v185
  %v215 = vmul.f32 %v142, %v185
  %v216 = vmul.f32 %v143, %v185
  %v217 = vmul.f32 %v144, %v185
  %v218 = vmul.f32 %v145, %v185
  %v219 = vmul.f32 %v146, %v185
  %v220 = vmul.f32 %v147, %v185
  %v221 = vmul.f32 %v148, %v185
  %v222 = vmul.f32 %v149, %v185
  %v223 = vmul.f32 %v150, %v185
  %v224 = vmul.f32 %v151, %v185
  %v225 = vmul.f32 %v152, %v185
  %v226 = vmul.f32 %v153, %v185
  %v227 = vmul.f32 %v154, %v185
  %v228 = vmul.f32 %v155, %v185
  %v229 = vmul.f32 %v156, %v185
  %v230 = vmul.f32 %v157, %v185
  %v231 = vmul.f32 %v158, %v185
  %v232 = vmul.f32 %v159, %v185
  %v233 = vmul.f32 %v160, %v185
  %v234 = vmul.f32 %v161, %v185
  %v235 = vmul.f32 %v162, %v185
  %v236 = vmul.f32 %v163, %v185
  %v237 = vmul.f32 %v164, %v185
  %v238 = vmul.f32 %v165, %v185
  %v239 = vmul.f32 %v166, %v185
  %v240 = vmul.f32 %v167, %v185
  %v241 = vmul.f32 %v168, %v185
  %v242 = vmul.f32 %v169, %v185
  %v243 = vmul.f32 %v170, %v185
  %v244 = vmul.f32 %v171, %v185
  %v245 = vmul.f32 %v172, %v185
  %v246 = vmul.f32 %v173, %v185
  %v247 = vmul.f32 %v174, %v185
  %v248 = vmul.f32 %v175, %v185
  %v249 = vmul.f32 %v176, %v185
  %v250 = vmul.f32 %v177, %v185
  %v252 = vlaneseq
  %v253 = vshrl.u32 %v252, 7
  %v254 = vsub.s32 0, %v253
  %v255 = vrot.slane %v102, %v254
  %v257 = vadd.f32 %v187, %v255
  %v258 = vadd.f32 %v188, %v255
  %v259 = vadd.f32 %v189, %v255
  %v260 = vadd.f32 %v190, %v255
  %v261 = vadd.f32 %v191, %v255
  %v262 = vadd.f32 %v192, %v255
  %v263 = vadd.f32 %v193, %v255
  %v264 = vadd.f32 %v194, %v255
  %v265 = vadd.f32 %v195, %v255
  %v266 = vadd.f32 %v196, %v255
  %v267 = vadd.f32 %v197, %v255
  %v268 = vadd.f32 %v198, %v255
  %v269 = vadd.f32 %v199, %v255
  %v270 = vadd.f32 %v200, %v255
  %v271 = vadd.f32 %v201, %v255
  %v272 = vadd.f32 %v202, %v255
  %v273 = vadd.f32 %v203, %v255
  %v274 = vadd.f32 %v204, %v255
  %v275 = vadd.f32 %v205, %v255
  %v276 = vadd.f32 %v206, %v255
  %v277 = vadd.f32 %v207, %v255
  %v278 = vadd.f32 %v208, %v255
  %v279 = vadd.f32 %v209, %v255
  %v280 = vadd.f32 %v210, %v255
  %v281 = vadd.f32 %v211, %v255
  %v282 = vadd.f32 %v212, %v255
  %v283 = vadd.f32 %v213, %v255
  %v284 = vadd.f32 %v214, %v255
  %v285 = vadd.f32 %v215, %v255
  %v286 = vadd.f32 %v216, %v255
  %v287 = vadd.f32 %v217, %v255
  %v288 = vadd.f32 %v218, %v255
  %v289 = vadd.f32 %v219, %v255
  %v290 = vadd.f32 %v220, %v255
  %v291 = vadd.f32 %v221, %v255
  %v292 = vadd.f32 %v222, %v255
  %v293 = vadd.f32 %v223, %v255
  %v294 = vadd.f32 %v224, %v255
  %v295 = vadd.f32 %v225, %v255
  %v296 = vadd.f32 %v226, %v255
  %v297 = vadd.f32 %v227, %v255
  %v298 = vadd.f32 %v228, %v255
  %v299 = vadd.f32 %v229, %v255
  %v300 = vadd.f32 %v230, %v255
  %v301 = vadd.f32 %v231, %v255
  %v302 = vadd.f32 %v232, %v255
  %v303 = vadd.f32 %v233, %v255
  %v304 = vadd.f32 %v234, %v255
  %v305 = vadd.f32 %v235, %v255
  %v306 = vadd.f32 %v236, %v255
  %v307 = vadd.f32 %v237, %v255
  %v308 = vadd.f32 %v238, %v255
  %v309 = vadd.f32 %v239, %v255
  %v310 = vadd.f32 %v240, %v255
  %v311 = vadd.f32 %v241, %v255
  %v312 = vadd.f32 %v242, %v255
  %v313 = vadd.f32 %v243, %v255
  %v314 = vadd.f32 %v244, %v255
  %v315 = vadd.f32 %v245, %v255
  %v316 = vadd.f32 %v246, %v255
  %v317 = vadd.f32 %v247, %v255
  %v318 = vadd.f32 %v248, %v255
  %v319 = vadd.f32 %v249, %v255
  %v320 = vadd.f32 %v250, %v255
  %v321 = vld [vmem:[%s5] sm:$0xff]
  %v322 = vld [vmem:[%s5 + $0x8] sm:$0xff]
  %v323 = vld [vmem:[%s5 + $0x10] sm:$0xff]
  %v324 = vld [vmem:[%s5 + $0x18] sm:$0xff]
  %v325 = vld [vmem:[%s5 + $0x20] sm:$0xff]
  %v326 = vld [vmem:[%s5 + $0x28] sm:$0xff]
  %v327 = vld [vmem:[%s5 + $0x30] sm:$0xff]
  %v328 = vld [vmem:[%s5 + $0x38] sm:$0xff]
  %v329 = vld [vmem:[%s5 + $0x40] sm:$0xff]
  %v330 = vld [vmem:[%s5 + $0x48] sm:$0xff]
  %v331 = vld [vmem:[%s5 + $0x50] sm:$0xff]
  %v332 = vld [vmem:[%s5 + $0x58] sm:$0xff]
  %v333 = vld [vmem:[%s5 + $0x60] sm:$0xff]
  %v334 = vld [vmem:[%s5 + $0x68] sm:$0xff]
  %v335 = vld [vmem:[%s5 + $0x70] sm:$0xff]
  %v336 = vld [vmem:[%s5 + $0x78] sm:$0xff]
  %v337 = vld [vmem:[%s5 + $0x80] sm:$0xff]
  %v338 = vld [vmem:[%s5 + $0x88] sm:$0xff]
  %v339 = vld [vmem:[%s5 + $0x90] sm:$0xff]
  %v340 = vld [vmem:[%s5 + $0x98] sm:$0xff]
  %v341 = vld [vmem:[%s5 + $0xa0] sm:$0xff]
  %v342 = vld [vmem:[%s5 + $0xa8] sm:$0xff]
  %v343 = vld [vmem:[%s5 + $0xb0] sm:$0xff]
  %v344 = vld [vmem:[%s5 + $0xb8] sm:$0xff]
  %v345 = vld [vmem:[%s5 + $0xc0] sm:$0xff]
  %v346 = vld [vmem:[%s5 + $0xc8] sm:$0xff]
  %v347 = vld [vmem:[%s5 + $0xd0] sm:$0xff]
  %v348 = vld [vmem:[%s5 + $0xd8] sm:$0xff]
  %v349 = vld [vmem:[%s5 + $0xe0] sm:$0xff]
  %v350 = vld [vmem:[%s5 + $0xe8] sm:$0xff]
  %v351 = vld [vmem:[%s5 + $0xf0] sm:$0xff]
  %v352 = vld [vmem:[%s5 + $0xf8] sm:$0xff]
  %v353 = vld [vmem:[%s5 + $0x100] sm:$0xff]
  %v354 = vld [vmem:[%s5 + $0x108] sm:$0xff]
  %v355 = vld [vmem:[%s5 + $0x110] sm:$0xff]
  %v356 = vld [vmem:[%s5 + $0x118] sm:$0xff]
  %v357 = vld [vmem:[%s5 + $0x120] sm:$0xff]
  %v358 = vld [vmem:[%s5 + $0x128] sm:$0xff]
  %v359 = vld [vmem:[%s5 + $0x130] sm:$0xff]
  %v360 = vld [vmem:[%s5 + $0x138] sm:$0xff]
  %v361 = vld [vmem:[%s5 + $0x140] sm:$0xff]
  %v362 = vld [vmem:[%s5 + $0x148] sm:$0xff]
  %v363 = vld [vmem:[%s5 + $0x150] sm:$0xff]
  %v364 = vld [vmem:[%s5 + $0x158] sm:$0xff]
  %v365 = vld [vmem:[%s5 + $0x160] sm:$0xff]
  %v366 = vld [vmem:[%s5 + $0x168] sm:$0xff]
  %v367 = vld [vmem:[%s5 + $0x170] sm:$0xff]
  %v368 = vld [vmem:[%s5 + $0x178] sm:$0xff]
  %v369 = vld [vmem:[%s5 + $0x180] sm:$0xff]
  %v370 = vld [vmem:[%s5 + $0x188] sm:$0xff]
  %v371 = vld [vmem:[%s5 + $0x190] sm:$0xff]
  %v372 = vld [vmem:[%s5 + $0x198] sm:$0xff]
  %v373 = vld [vmem:[%s5 + $0x1a0] sm:$0xff]
  %v374 = vld [vmem:[%s5 + $0x1a8] sm:$0xff]
  %v375 = vld [vmem:[%s5 + $0x1b0] sm:$0xff]
  %v376 = vld [vmem:[%s5 + $0x1b8] sm:$0xff]
  %v377 = vld [vmem:[%s5 + $0x1c0] sm:$0xff]
  %v378 = vld [vmem:[%s5 + $0x1c8] sm:$0xff]
  %v379 = vld [vmem:[%s5 + $0x1d0] sm:$0xff]
  %v380 = vld [vmem:[%s5 + $0x1d8] sm:$0xff]
  %v381 = vld [vmem:[%s5 + $0x1e0] sm:$0xff]
  %v382 = vld [vmem:[%s5 + $0x1e8] sm:$0xff]
  %v383 = vld [vmem:[%s5 + $0x1f0] sm:$0xff]
  %v384 = vld [vmem:[%s5 + $0x1f8] sm:$0xff]
  %v385 = vld [vmem:[%s6] sm:$0x1]
  %v386 = vld [vmem:[%s7] sm:$0x1]
  %v387 = vld [vmem:[%s8] sm:$0x1]
  %v388 = vld [vmem:[%s9] sm:$0x1]
  %v389 = vmul.f32 %v385, 0.001953125
  %v390 = vmul.f32 %v386, 0.001953125
  %v391 = vmul.f32 %v389, %v389
  %v392 = vsub.f32 %v390, %v391
  %v393 = vmax.f32 %v392, 0.0
  %v395 = vlaneseq
  %v396 = vshrl.u32 %v395, 7
  %v397 = vsub.s32 0, %v396
  %v398 = vrot.slane %v389, %v397
  %v400 = vsub.f32 %v321, %v398
  %v401 = vsub.f32 %v322, %v398
  %v402 = vsub.f32 %v323, %v398
  %v403 = vsub.f32 %v324, %v398
  %v404 = vsub.f32 %v325, %v398
  %v405 = vsub.f32 %v326, %v398
  %v406 = vsub.f32 %v327, %v398
  %v407 = vsub.f32 %v328, %v398
  %v408 = vsub.f32 %v329, %v398
  %v409 = vsub.f32 %v330, %v398
  %v410 = vsub.f32 %v331, %v398
  %v411 = vsub.f32 %v332, %v398
  %v412 = vsub.f32 %v333, %v398
  %v413 = vsub.f32 %v334, %v398
  %v414 = vsub.f32 %v335, %v398
  %v415 = vsub.f32 %v336, %v398
  %v416 = vsub.f32 %v337, %v398
  %v417 = vsub.f32 %v338, %v398
  %v418 = vsub.f32 %v339, %v398
  %v419 = vsub.f32 %v340, %v398
  %v420 = vsub.f32 %v341, %v398
  %v421 = vsub.f32 %v342, %v398
  %v422 = vsub.f32 %v343, %v398
  %v423 = vsub.f32 %v344, %v398
  %v424 = vsub.f32 %v345, %v398
  %v425 = vsub.f32 %v346, %v398
  %v426 = vsub.f32 %v347, %v398
  %v427 = vsub.f32 %v348, %v398
  %v428 = vsub.f32 %v349, %v398
  %v429 = vsub.f32 %v350, %v398
  %v430 = vsub.f32 %v351, %v398
  %v431 = vsub.f32 %v352, %v398
  %v432 = vsub.f32 %v353, %v398
  %v433 = vsub.f32 %v354, %v398
  %v434 = vsub.f32 %v355, %v398
  %v435 = vsub.f32 %v356, %v398
  %v436 = vsub.f32 %v357, %v398
  %v437 = vsub.f32 %v358, %v398
  %v438 = vsub.f32 %v359, %v398
  %v439 = vsub.f32 %v360, %v398
  %v440 = vsub.f32 %v361, %v398
  %v441 = vsub.f32 %v362, %v398
  %v442 = vsub.f32 %v363, %v398
  %v443 = vsub.f32 %v364, %v398
  %v444 = vsub.f32 %v365, %v398
  %v445 = vsub.f32 %v366, %v398
  %v446 = vsub.f32 %v367, %v398
  %v447 = vsub.f32 %v368, %v398
  %v448 = vsub.f32 %v369, %v398
  %v449 = vsub.f32 %v370, %v398
  %v450 = vsub.f32 %v371, %v398
  %v451 = vsub.f32 %v372, %v398
  %v452 = vsub.f32 %v373, %v398
  %v453 = vsub.f32 %v374, %v398
  %v454 = vsub.f32 %v375, %v398
  %v455 = vsub.f32 %v376, %v398
  %v456 = vsub.f32 %v377, %v398
  %v457 = vsub.f32 %v378, %v398
  %v458 = vsub.f32 %v379, %v398
  %v459 = vsub.f32 %v380, %v398
  %v460 = vsub.f32 %v381, %v398
  %v461 = vsub.f32 %v382, %v398
  %v462 = vsub.f32 %v383, %v398
  %v463 = vsub.f32 %v384, %v398
  %v464 = vadd.f32 %v393, 1e-05
  %v465 = vrsqrt.pop %v464
  %v466 = vmul.f32 %v465, %v387
  %v468 = vlaneseq
  %v469 = vshrl.u32 %v468, 7
  %v470 = vsub.s32 0, %v469
  %v471 = vrot.slane %v466, %v470
  %v473 = vmul.f32 %v400, %v471
  %v474 = vmul.f32 %v401, %v471
  %v475 = vmul.f32 %v402, %v471
  %v476 = vmul.f32 %v403, %v471
  %v477 = vmul.f32 %v404, %v471
  %v478 = vmul.f32 %v405, %v471
  %v479 = vmul.f32 %v406, %v471
  %v480 = vmul.f32 %v407, %v471
  %v481 = vmul.f32 %v408, %v471
  %v482 = vmul.f32 %v409, %v471
  %v483 = vmul.f32 %v410, %v471
  %v484 = vmul.f32 %v411, %v471
  %v485 = vmul.f32 %v412, %v471
  %v486 = vmul.f32 %v413, %v471
  %v487 = vmul.f32 %v414, %v471
  %v488 = vmul.f32 %v415, %v471
  %v489 = vmul.f32 %v416, %v471
  %v490 = vmul.f32 %v417, %v471
  %v491 = vmul.f32 %v418, %v471
  %v492 = vmul.f32 %v419, %v471
  %v493 = vmul.f32 %v420, %v471
  %v494 = vmul.f32 %v421, %v471
  %v495 = vmul.f32 %v422, %v471
  %v496 = vmul.f32 %v423, %v471
  %v497 = vmul.f32 %v424, %v471
  %v498 = vmul.f32 %v425, %v471
  %v499 = vmul.f32 %v426, %v471
  %v500 = vmul.f32 %v427, %v471
  %v501 = vmul.f32 %v428, %v471
  %v502 = vmul.f32 %v429, %v471
  %v503 = vmul.f32 %v430, %v471
  %v504 = vmul.f32 %v431, %v471
  %v505 = vmul.f32 %v432, %v471
  %v506 = vmul.f32 %v433, %v471
  %v507 = vmul.f32 %v434, %v471
  %v508 = vmul.f32 %v435, %v471
  %v509 = vmul.f32 %v436, %v471
  %v510 = vmul.f32 %v437, %v471
  %v511 = vmul.f32 %v438, %v471
  %v512 = vmul.f32 %v439, %v471
  %v513 = vmul.f32 %v440, %v471
  %v514 = vmul.f32 %v441, %v471
  %v515 = vmul.f32 %v442, %v471
  %v516 = vmul.f32 %v443, %v471
  %v517 = vmul.f32 %v444, %v471
  %v518 = vmul.f32 %v445, %v471
  %v519 = vmul.f32 %v446, %v471
  %v520 = vmul.f32 %v447, %v471
  %v521 = vmul.f32 %v448, %v471
  %v522 = vmul.f32 %v449, %v471
  %v523 = vmul.f32 %v450, %v471
  %v524 = vmul.f32 %v451, %v471
  %v525 = vmul.f32 %v452, %v471
  %v526 = vmul.f32 %v453, %v471
  %v527 = vmul.f32 %v454, %v471
  %v528 = vmul.f32 %v455, %v471
  %v529 = vmul.f32 %v456, %v471
  %v530 = vmul.f32 %v457, %v471
  %v531 = vmul.f32 %v458, %v471
  %v532 = vmul.f32 %v459, %v471
  %v533 = vmul.f32 %v460, %v471
  %v534 = vmul.f32 %v461, %v471
  %v535 = vmul.f32 %v462, %v471
  %v536 = vmul.f32 %v463, %v471
  %v538 = vlaneseq
  %v539 = vshrl.u32 %v538, 7
  %v540 = vsub.s32 0, %v539
  %v541 = vrot.slane %v388, %v540
  %v543 = vadd.f32 %v473, %v541
  %v544 = vadd.f32 %v474, %v541
  %v545 = vadd.f32 %v475, %v541
  %v546 = vadd.f32 %v476, %v541
  %v547 = vadd.f32 %v477, %v541
  %v548 = vadd.f32 %v478, %v541
  %v549 = vadd.f32 %v479, %v541
  %v550 = vadd.f32 %v480, %v541
  %v551 = vadd.f32 %v481, %v541
  %v552 = vadd.f32 %v482, %v541
  %v553 = vadd.f32 %v483, %v541
  %v554 = vadd.f32 %v484, %v541
  %v555 = vadd.f32 %v485, %v541
  %v556 = vadd.f32 %v486, %v541
  %v557 = vadd.f32 %v487, %v541
  %v558 = vadd.f32 %v488, %v541
  %v559 = vadd.f32 %v489, %v541
  %v560 = vadd.f32 %v490, %v541
  %v561 = vadd.f32 %v491, %v541
  %v562 = vadd.f32 %v492, %v541
  %v563 = vadd.f32 %v493, %v541
  %v564 = vadd.f32 %v494, %v541
  %v565 = vadd.f32 %v495, %v541
  %v566 = vadd.f32 %v496, %v541
  %v567 = vadd.f32 %v497, %v541
  %v568 = vadd.f32 %v498, %v541
  %v569 = vadd.f32 %v499, %v541
  %v570 = vadd.f32 %v500, %v541
  %v571 = vadd.f32 %v501, %v541
  %v572 = vadd.f32 %v502, %v541
  %v573 = vadd.f32 %v503, %v541
  %v574 = vadd.f32 %v504, %v541
  %v575 = vadd.f32 %v505, %v541
  %v576 = vadd.f32 %v506, %v541
  %v577 = vadd.f32 %v507, %v541
  %v578 = vadd.f32 %v508, %v541
  %v579 = vadd.f32 %v509, %v541
  %v580 = vadd.f32 %v510, %v541
  %v581 = vadd.f32 %v511, %v541
  %v582 = vadd.f32 %v512, %v541
  %v583 = vadd.f32 %v513, %v541
  %v584 = vadd.f32 %v514, %v541
  %v585 = vadd.f32 %v515, %v541
  %v586 = vadd.f32 %v516, %v541
  %v587 = vadd.f32 %v517, %v541
  %v588 = vadd.f32 %v518, %v541
  %v589 = vadd.f32 %v519, %v541
  %v590 = vadd.f32 %v520, %v541
  %v591 = vadd.f32 %v521, %v541
  %v592 = vadd.f32 %v522, %v541
  %v593 = vadd.f32 %v523, %v541
  %v594 = vadd.f32 %v524, %v541
  %v595 = vadd.f32 %v525, %v541
  %v596 = vadd.f32 %v526, %v541
  %v597 = vadd.f32 %v527, %v541
  %v598 = vadd.f32 %v528, %v541
  %v599 = vadd.f32 %v529, %v541
  %v600 = vadd.f32 %v530, %v541
  %v601 = vadd.f32 %v531, %v541
  %v602 = vadd.f32 %v532, %v541
  %v603 = vadd.f32 %v533, %v541
  %v604 = vadd.f32 %v534, %v541
  %v605 = vadd.f32 %v535, %v541
  %v606 = vadd.f32 %v536, %v541
  %v607 = vadd.f32 %v257, %v543
  %v608 = vadd.f32 %v258, %v544
  %v609 = vadd.f32 %v259, %v545
  %v610 = vadd.f32 %v260, %v546
  %v611 = vadd.f32 %v261, %v547
  %v612 = vadd.f32 %v262, %v548
  %v613 = vadd.f32 %v263, %v549
  %v614 = vadd.f32 %v264, %v550
  %v615 = vadd.f32 %v265, %v551
  %v616 = vadd.f32 %v266, %v552
  %v617 = vadd.f32 %v267, %v553
  %v618 = vadd.f32 %v268, %v554
  %v619 = vadd.f32 %v269, %v555
  %v620 = vadd.f32 %v270, %v556
  %v621 = vadd.f32 %v271, %v557
  %v622 = vadd.f32 %v272, %v558
  %v623 = vadd.f32 %v273, %v559
  %v624 = vadd.f32 %v274, %v560
  %v625 = vadd.f32 %v275, %v561
  %v626 = vadd.f32 %v276, %v562
  %v627 = vadd.f32 %v277, %v563
  %v628 = vadd.f32 %v278, %v564
  %v629 = vadd.f32 %v279, %v565
  %v630 = vadd.f32 %v280, %v566
  %v631 = vadd.f32 %v281, %v567
  %v632 = vadd.f32 %v282, %v568
  %v633 = vadd.f32 %v283, %v569
  %v634 = vadd.f32 %v284, %v570
  %v635 = vadd.f32 %v285, %v571
  %v636 = vadd.f32 %v286, %v572
  %v637 = vadd.f32 %v287, %v573
  %v638 = vadd.f32 %v288, %v574
  %v639 = vadd.f32 %v289, %v575
  %v640 = vadd.f32 %v290, %v576
  %v641 = vadd.f32 %v291, %v577
  %v642 = vadd.f32 %v292, %v578
  %v643 = vadd.f32 %v293, %v579
  %v644 = vadd.f32 %v294, %v580
  %v645 = vadd.f32 %v295, %v581
  %v646 = vadd.f32 %v296, %v582
  %v647 = vadd.f32 %v297, %v583
  %v648 = vadd.f32 %v298, %v584
  %v649 = vadd.f32 %v299, %v585
  %v650 = vadd.f32 %v300, %v586
  %v651 = vadd.f32 %v301, %v587
  %v652 = vadd.f32 %v302, %v588
  %v653 = vadd.f32 %v303, %v589
  %v654 = vadd.f32 %v304, %v590
  %v655 = vadd.f32 %v305, %v591
  %v656 = vadd.f32 %v306, %v592
  %v657 = vadd.f32 %v307, %v593
  %v658 = vadd.f32 %v308, %v594
  %v659 = vadd.f32 %v309, %v595
  %v660 = vadd.f32 %v310, %v596
  %v661 = vadd.f32 %v311, %v597
  %v662 = vadd.f32 %v312, %v598
  %v663 = vadd.f32 %v313, %v599
  %v664 = vadd.f32 %v314, %v600
  %v665 = vadd.f32 %v315, %v601
  %v666 = vadd.f32 %v316, %v602
  %v667 = vadd.f32 %v317, %v603
  %v668 = vadd.f32 %v318, %v604
  %v669 = vadd.f32 %v319, %v605
  %v670 = vadd.f32 %v320, %v606
  %v671 = vmax.f32 %v607, 0.0
  %v672 = vmax.f32 %v608, 0.0
  %v673 = vmax.f32 %v609, 0.0
  %v674 = vmax.f32 %v610, 0.0
  %v675 = vmax.f32 %v611, 0.0
  %v676 = vmax.f32 %v612, 0.0
  %v677 = vmax.f32 %v613, 0.0
  %v678 = vmax.f32 %v614, 0.0
  %v679 = vmax.f32 %v615, 0.0
  %v680 = vmax.f32 %v616, 0.0
  %v681 = vmax.f32 %v617, 0.0
  %v682 = vmax.f32 %v618, 0.0
  %v683 = vmax.f32 %v619, 0.0
  %v684 = vmax.f32 %v620, 0.0
  %v685 = vmax.f32 %v621, 0.0
  %v686 = vmax.f32 %v622, 0.0
  %v687 = vmax.f32 %v623, 0.0
  %v688 = vmax.f32 %v624, 0.0
  %v689 = vmax.f32 %v625, 0.0
  %v690 = vmax.f32 %v626, 0.0
  %v691 = vmax.f32 %v627, 0.0
  %v692 = vmax.f32 %v628, 0.0
  %v693 = vmax.f32 %v629, 0.0
  %v694 = vmax.f32 %v630, 0.0
  %v695 = vmax.f32 %v631, 0.0
  %v696 = vmax.f32 %v632, 0.0
  %v697 = vmax.f32 %v633, 0.0
  %v698 = vmax.f32 %v634, 0.0
  %v699 = vmax.f32 %v635, 0.0
  %v700 = vmax.f32 %v636, 0.0
  %v701 = vmax.f32 %v637, 0.0
  %v702 = vmax.f32 %v638, 0.0
  %v703 = vmax.f32 %v639, 0.0
  %v704 = vmax.f32 %v640, 0.0
  %v705 = vmax.f32 %v641, 0.0
  %v706 = vmax.f32 %v642, 0.0
  %v707 = vmax.f32 %v643, 0.0
  %v708 = vmax.f32 %v644, 0.0
  %v709 = vmax.f32 %v645, 0.0
  %v710 = vmax.f32 %v646, 0.0
  %v711 = vmax.f32 %v647, 0.0
  %v712 = vmax.f32 %v648, 0.0
  %v713 = vmax.f32 %v649, 0.0
  %v714 = vmax.f32 %v650, 0.0
  %v715 = vmax.f32 %v651, 0.0
  %v716 = vmax.f32 %v652, 0.0
  %v717 = vmax.f32 %v653, 0.0
  %v718 = vmax.f32 %v654, 0.0
  %v719 = vmax.f32 %v655, 0.0
  %v720 = vmax.f32 %v656, 0.0
  %v721 = vmax.f32 %v657, 0.0
  %v722 = vmax.f32 %v658, 0.0
  %v723 = vmax.f32 %v659, 0.0
  %v724 = vmax.f32 %v660, 0.0
  %v725 = vmax.f32 %v661, 0.0
  %v726 = vmax.f32 %v662, 0.0
  %v727 = vmax.f32 %v663, 0.0
  %v728 = vmax.f32 %v664, 0.0
  %v729 = vmax.f32 %v665, 0.0
  %v730 = vmax.f32 %v666, 0.0
  %v731 = vmax.f32 %v667, 0.0
  %v732 = vmax.f32 %v668, 0.0
  %v733 = vmax.f32 %v669, 0.0
  %v734 = vmax.f32 %v670, 0.0
  %735 = vst [vmem:[%s10] sm:$0xff] %v671
  %736 = vst [vmem:[%s10 + $0x8] sm:$0xff] %v672
  %737 = vst [vmem:[%s10 + $0x10] sm:$0xff] %v673
  %738 = vst [vmem:[%s10 + $0x18] sm:$0xff] %v674
  %739 = vst [vmem:[%s10 + $0x20] sm:$0xff] %v675
  %740 = vst [vmem:[%s10 + $0x28] sm:$0xff] %v676
  %741 = vst [vmem:[%s10 + $0x30] sm:$0xff] %v677
  %742 = vst [vmem:[%s10 + $0x38] sm:$0xff] %v678
  %743 = vst [vmem:[%s10 + $0x40] sm:$0xff] %v679
  %744 = vst [vmem:[%s10 + $0x48] sm:$0xff] %v680
  %745 = vst [vmem:[%s10 + $0x50] sm:$0xff] %v681
  %746 = vst [vmem:[%s10 + $0x58] sm:$0xff] %v682
  %747 = vst [vmem:[%s10 + $0x60] sm:$0xff] %v683
  %748 = vst [vmem:[%s10 + $0x68] sm:$0xff] %v684
  %749 = vst [vmem:[%s10 + $0x70] sm:$0xff] %v685
  %750 = vst [vmem:[%s10 + $0x78] sm:$0xff] %v686
  %751 = vst [vmem:[%s10 + $0x80] sm:$0xff] %v687
  %752 = vst [vmem:[%s10 + $0x88] sm:$0xff] %v688
  %753 = vst [vmem:[%s10 + $0x90] sm:$0xff] %v689
  %754 = vst [vmem:[%s10 + $0x98] sm:$0xff] %v690
  %755 = vst [vmem:[%s10 + $0xa0] sm:$0xff] %v691
  %756 = vst [vmem:[%s10 + $0xa8] sm:$0xff] %v692
  %757 = vst [vmem:[%s10 + $0xb0] sm:$0xff] %v693
  %758 = vst [vmem:[%s10 + $0xb8] sm:$0xff] %v694
  %759 = vst [vmem:[%s10 + $0xc0] sm:$0xff] %v695
  %760 = vst [vmem:[%s10 + $0xc8] sm:$0xff] %v696
  %761 = vst [vmem:[%s10 + $0xd0] sm:$0xff] %v697
  %762 = vst [vmem:[%s10 + $0xd8] sm:$0xff] %v698
  %763 = vst [vmem:[%s10 + $0xe0] sm:$0xff] %v699
  %764 = vst [vmem:[%s10 + $0xe8] sm:$0xff] %v700
  %765 = vst [vmem:[%s10 + $0xf0] sm:$0xff] %v701
  %766 = vst [vmem:[%s10 + $0xf8] sm:$0xff] %v702
  %767 = vst [vmem:[%s10 + $0x100] sm:$0xff] %v703
  %768 = vst [vmem:[%s10 + $0x108] sm:$0xff] %v704
  %769 = vst [vmem:[%s10 + $0x110] sm:$0xff] %v705
  %770 = vst [vmem:[%s10 + $0x118] sm:$0xff] %v706
  %771 = vst [vmem:[%s10 + $0x120] sm:$0xff] %v707
  %772 = vst [vmem:[%s10 + $0x128] sm:$0xff] %v708
  %773 = vst [vmem:[%s10 + $0x130] sm:$0xff] %v709
  %774 = vst [vmem:[%s10 + $0x138] sm:$0xff] %v710
  %775 = vst [vmem:[%s10 + $0x140] sm:$0xff] %v711
  %776 = vst [vmem:[%s10 + $0x148] sm:$0xff] %v712
  %777 = vst [vmem:[%s10 + $0x150] sm:$0xff] %v713
  %778 = vst [vmem:[%s10 + $0x158] sm:$0xff] %v714
  %779 = vst [vmem:[%s10 + $0x160] sm:$0xff] %v715
  %780 = vst [vmem:[%s10 + $0x168] sm:$0xff] %v716
  %781 = vst [vmem:[%s10 + $0x170] sm:$0xff] %v717
  %782 = vst [vmem:[%s10 + $0x178] sm:$0xff] %v718
  %783 = vst [vmem:[%s10 + $0x180] sm:$0xff] %v719
  %784 = vst [vmem:[%s10 + $0x188] sm:$0xff] %v720
  %785 = vst [vmem:[%s10 + $0x190] sm:$0xff] %v721
  %786 = vst [vmem:[%s10 + $0x198] sm:$0xff] %v722
  %787 = vst [vmem:[%s10 + $0x1a0] sm:$0xff] %v723
  %788 = vst [vmem:[%s10 + $0x1a8] sm:$0xff] %v724
  %789 = vst [vmem:[%s10 + $0x1b0] sm:$0xff] %v725
  %790 = vst [vmem:[%s10 + $0x1b8] sm:$0xff] %v726
  %791 = vst [vmem:[%s10 + $0x1c0] sm:$0xff] %v727
  %792 = vst [vmem:[%s10 + $0x1c8] sm:$0xff] %v728
  %793 = vst [vmem:[%s10 + $0x1d0] sm:$0xff] %v729
  %794 = vst [vmem:[%s10 + $0x1d8] sm:$0xff] %v730
  %795 = vst [vmem:[%s10 + $0x1e0] sm:$0xff] %v731
  %796 = vst [vmem:[%s10 + $0x1e8] sm:$0xff] %v732
  %797 = vst [vmem:[%s10 + $0x1f0] sm:$0xff] %v733
  %798 = vst [vmem:[%s10 + $0x1f8] sm:$0xff] %v734
  // Predicated region
  $region42: #{bottleneck_forward.13} parent=0 // pred_check
    _
  $region43: #{bottleneck_forward.13} parent=0 // pred_check_branch
    %800 = sbr.rel (0) target = $region45
  $region44: #{bottleneck_forward.13} parent=0 // pred_region
    _
  $region45: #{bottleneck_forward.13} parent=0 // pred_fallthru
    _
  // Predicated region
  $region46: #{bottleneck_forward.13} parent=0 // pred_check
    _
  $region47: #{bottleneck_forward.13} parent=0 // pred_check_branch
    %802 = sbr.rel (0) target = $region49
  $region48: #{bottleneck_forward.13} parent=0 // pred_region
    _
  $region49: #{bottleneck_forward.13} parent=0 // pred_fallthru
    _

</llo_original>
